<compile_context>
chip_gen: v7x
topology: tpu7x:2x2x1
jax: 0.10.0
libtpu: 0.0.40
codegen_flags: <defaults>
</compile_context>

<pallas_src>
import functools

import jax
import jax.numpy as jnp
from jax.experimental import pallas as pl
from jax.experimental.pallas import tpu as pltpu

NUM_CLASSES = 4
REG_MAX = 16          # -> reg_max+1 = 17 bins per side, pred_dist last dim = 34
MAX_L_TILE = 8192     # anchors per grid step (lane axis), multiple of 128
CH_SUB = 8            # sublane-groups (of 128 anchors) processed per inner chunk


def _round_up(x, m):
    return (x + m - 1) // m * m


def _bbox_loss_kernel(packed_ref, pd_ref, out_ref, *, reg_max, ch, n_chunks):
    """One grid step over a lane tile of anchors.

    packed_ref: (B, 7, n_sub_tile, 128) f32  rows = [bw, maskf, p0, p1, t0, t1, anchor]
    pd_ref:     (B, 2*(reg_max+1), n_sub_tile, 128) bf16  (side-major, bin-minor)
    out_ref:    (1, 5*B, ch, 128) f32 per-lane partial sums
                rows (q*B..q*B+B-1) = [num_pos, l1, iou, bw, dfl]
    """
    R1 = reg_max + 1
    f32 = jnp.float32
    B = packed_ref.shape[0]

    acc = [jnp.zeros((B, ch, 128), f32) for _ in range(5)]

    # Static unroll: n_chunks <= MAX_L_TILE/128/CH_SUB = 8, all slice starts static.
    for c in range(n_chunks):
        sl = pl.ds(c * ch, ch)

        # ---- lazy per-row feature slices (item 1), sublane-dense (item 4) ----
        bw   = packed_ref[:, 0, sl, :]
        mask = packed_ref[:, 1, sl, :]
        p0   = packed_ref[:, 2, sl, :]
        p1   = packed_ref[:, 3, sl, :]
        t0   = packed_ref[:, 4, sl, :]
        t1   = packed_ref[:, 5, sl, :]
        anc  = packed_ref[:, 6, sl, :]

        # ---- L1 ----
        l1_c = (jnp.abs(p0 - t0) + jnp.abs(p1 - t1)) * mask

        # ---- 1-D segment IoU ----
        inter = jnp.maximum(jnp.minimum(p1, t1) - jnp.maximum(p0, t0), 0.0)
        union = (p1 - p0) + (t1 - t0) - inter
        union = jnp.where(mask > 0.0, union, 1.0)          # 0/0 guard on negatives/padding
        iou_c = (1.0 - inter * pl.reciprocal(union, approx=True)) * mask

        # ---- DFL targets ----
        ld = jnp.clip(anc - t0, 0.0, reg_max - 0.01)
        rd = jnp.clip(t1 - anc, 0.0, reg_max - 0.01)

        def logits(k, r):
            # bf16 in HBM/VMEM, f32 for the math (item 8)
            return pd_ref[:, k * R1 + r, sl, :].astype(f32)

        def df_side(k, tgt):
            # two passes over the 17 bins with small accumulators:
            # keeps live vregs low instead of holding the whole (B,R1,ch,128) slab
            m = logits(k, 0)
            for r in range(1, R1):
                m = jnp.maximum(m, logits(k, r))
            esum = jnp.zeros_like(m)
            gath = jnp.zeros_like(m)
            for r in range(R1):
                x = logits(k, r)
                esum = esum + jnp.exp(x - m)
                # hat weight == w_left at floor(tgt) and w_right at floor(tgt)+1 (item 10)
                gath = gath + x * jnp.maximum(1.0 - jnp.abs(tgt - float(r)), 0.0)
            # CE_left*w_left + CE_right*w_right == lse - weighted gather
            return (m + jnp.log(esum)) - gath

        dfl_c = 0.5 * (df_side(0, ld) + df_side(1, rd)) * bw

        for q, v in enumerate((mask, l1_c, iou_c, bw, dfl_c)):
            acc[q] = acc[q] + v

    # per-lane partial sums only; the scalar reduction happens in JAX glue (item 9)
    for q in range(5):
        out_ref[0, q * B:(q + 1) * B, :, :] = acc[q]


@functools.partial(jax.jit, static_argnames=("num_classes", "reg_max"))
def bbox_loss_pallas(pred_dist, pred_bboxes, anchor_points, assigned_labels,
                     assigned_bboxes, assigned_scores, assigned_scores_sum,
                     *, num_classes=NUM_CLASSES, reg_max=REG_MAX):
    B, L, D = pred_dist.shape
    R1 = reg_max + 1
    assert D == 2 * R1
    f32 = jnp.float32

    # ---- tile / chunk geometry -------------------------------------------
    lp128 = _round_up(L, 128)
    n_sub_req = lp128 // 128
    max_sub_tile = MAX_L_TILE // 128
    if n_sub_req <= CH_SUB:
        # small problem: one tile, block == full dims (always a legal BlockSpec)
        n_sub_tile = n_sub_req
    else:
        # >=2 tiles whenever possible so both v7x TensorCores get work (item 6);
        # multiple of 16 sublane-groups keeps bf16 blocks tile-aligned.
        target_tiles = max(2, pl.cdiv(n_sub_req, max_sub_tile))
        n_sub_tile = _round_up(pl.cdiv(n_sub_req, target_tiles), 16)
    num_tiles = pl.cdiv(n_sub_req, n_sub_tile)
    l_pad = num_tiles * n_sub_tile * 128
    ch = min(CH_SUB, n_sub_tile)
    n_chunks = n_sub_tile // ch

    # ---- wrapper-side relayout (layout plumbing, fused under jit) ---------
    # item 3: precompute mask / bbox_weight; only 7 small rows enter the kernel.
    maskf = (assigned_labels != num_classes).astype(f32)                 # (B, L)
    bw = assigned_scores.astype(f32).sum(-1) * maskf                     # (B, L)
    pb = pred_bboxes.astype(f32)
    ab = assigned_bboxes.astype(f32)
    packed = jnp.stack([bw, maskf, pb[..., 0], pb[..., 1],
                        ab[..., 0], ab[..., 1],
                        anchor_points[..., 0].astype(f32)], axis=1)      # (B, 7, L)

    # item 2(b)/8: single fused transpose+cast+pad pass of pred_dist, stored bf16
    # (TODO(synk): producing pred_dist channel-major upstream would remove this pass)
    pd = jnp.transpose(pred_dist.reshape(B, L, 2, R1), (0, 2, 3, 1))     # (B, 2, R1, L)
    pd = pd.reshape(B, 2 * R1, L).astype(jnp.bfloat16)

    if l_pad != L:
        pad = l_pad - L
        packed = jnp.pad(packed, ((0, 0), (0, 0), (0, pad)))   # zeros => maskf=bw=0
        pd = jnp.pad(pd, ((0, 0), (0, 0), (0, pad)))
    n_sub_total = l_pad // 128
    packed = packed.reshape(B, 7, n_sub_total, 128)              # anchors sublane-dense
    pd = pd.reshape(B, 2 * R1, n_sub_total, 128)

    kernel = functools.partial(_bbox_loss_kernel,
                               reg_max=reg_max, ch=ch, n_chunks=n_chunks)

    cost = pl.CostEstimate(
        flops=int(B * l_pad * (2 * R1 * 10 + 40)),
        transcendentals=int(B * l_pad * (2 * R1 + 3)),
        bytes_accessed=int(B * l_pad * (7 * 4 + 2 * R1 * 2)
                           + num_tiles * 5 * B * ch * 128 * 4),
    )

    partials = pl.pallas_call(
        kernel,
        out_shape=jax.ShapeDtypeStruct((num_tiles, 5 * B, ch, 128), jnp.float32),
        grid=(num_tiles,),
        in_specs=[
            pl.BlockSpec((B, 7, n_sub_tile, 128), lambda i: (0, 0, i, 0)),
            pl.BlockSpec((B, 2 * R1, n_sub_tile, 128), lambda i: (0, 0, i, 0)),
        ],
        out_specs=pl.BlockSpec((1, 5 * B, ch, 128), lambda i: (i, 0, 0, 0)),
        compiler_params=pltpu.CompilerParams(dimension_semantics=("parallel",)),
        cost_estimate=cost,
    )(packed, pd)

    # tiny cross-tile / cross-lane reduction in plain JAX (item 9)
    sums = partials.reshape(num_tiles, 5, B, ch, 128).sum(axis=(0, 2, 3, 4))  # (5,)
    num_pos, l1_sum, iou_sum, bw_sum, dfl_sum = (sums[0], sums[1], sums[2],
                                                 sums[3], sums[4])

    # `if num_pos > 0` branch of the torch module
    pos = num_pos > 0
    safe_np = jnp.maximum(num_pos, 1.0)
    loss_l1 = jnp.where(pos, l1_sum / (safe_np * 2.0), 0.0)
    loss_iou = jnp.where(pos, (iou_sum / safe_np) * bw_sum / assigned_scores_sum, 0.0)
    loss_dfl = jnp.where(pos, dfl_sum / assigned_scores_sum, 0.0)
    return loss_l1, loss_iou, loss_dfl


# ---------------- pure-JAX reference (mirror of the torch module) --------------
def bbox_loss_ref(pred_dist, pred_bboxes, anchor_points, assigned_labels,
                  assigned_bboxes, assigned_scores, assigned_scores_sum,
                  *, num_classes=NUM_CLASSES, reg_max=REG_MAX):
    mask = assigned_labels != num_classes
    maskf = mask.astype(jnp.float32)
    num_pos = maskf.sum()

    loss_l1 = (jnp.abs(pred_bboxes - assigned_bboxes) * maskf[..., None]).sum() / (num_pos * 2)

    p0, p1 = pred_bboxes[..., 0], pred_bboxes[..., 1]
    t0, t1 = assigned_bboxes[..., 0], assigned_bboxes[..., 1]
    inter = jnp.maximum(jnp.minimum(p1, t1) - jnp.maximum(p0, t0), 0.0)
    union = jnp.where(mask, (p1 - p0) + (t1 - t0) - inter, 1.0)
    mean_iou_loss = ((1.0 - inter / union) * maskf).sum() / num_pos
    bw = assigned_scores.sum(-1) * maskf
    loss_iou = mean_iou_loss * bw.sum() / assigned_scores_sum

    anchor = anchor_points[..., 0]
    ld = jnp.clip(anchor - t0, 0.0, reg_max - 0.01)
    rd = jnp.clip(t1 - anchor, 0.0, reg_max - 0.01)
    R1 = reg_max + 1
    pd = pred_dist.reshape(pred_dist.shape[0], pred_dist.shape[1], 2, R1)

    def ce(logits, t):
        lse = jax.scipy.special.logsumexp(logits, axis=-1)
        at = jnp.take_along_axis(logits, t[..., None], axis=-1)[..., 0]
        return lse - at

    total = 0.0
    for k, tgt in enumerate((ld, rd)):
        logits = pd[..., k, :]
        tl = jnp.floor(tgt).astype(jnp.int32)
        tr = tl + 1
        wl = tr.astype(jnp.float32) - tgt
        wr = 1.0 - wl
        total = total + ce(logits, tl) * wl + ce(logits, tr) * wr
    dfl_per = total * 0.5
    loss_dfl = (dfl_per * assigned_scores.sum(-1) * maskf).sum() / assigned_scores_sum
    return loss_l1, loss_iou, loss_dfl


if __name__ == "__main__":
    B, L = 2, 256
    R1 = REG_MAX + 1
    key = jax.random.PRNGKey(0)
    k1, k2, k3, k4, k5, k6 = jax.random.split(key, 6)

    pred_dist = jax.random.normal(k1, (B, L, 2 * R1), jnp.float32)
    # anchors: center positions, same for every batch element
    anchor_points = jnp.tile((jnp.arange(L, dtype=jnp.float32) + 0.5)[None, :, None], (B, 1, 1))
    # assigned segments around each anchor (so ltrb lands inside [0, reg_max))
    u = jax.random.uniform(k2, (B, L, 2), jnp.float32, 0.5, REG_MAX - 0.5)
    assigned_bboxes = jnp.stack(
        [anchor_points[..., 0] - u[..., 0], anchor_points[..., 0] + u[..., 1]], axis=-1)
    pred_bboxes = assigned_bboxes + jax.random.normal(k3, (B, L, 2), jnp.float32) * 0.5
    # labels in [0, NUM_CLASSES]; == NUM_CLASSES means background (negative)
    assigned_labels = jax.random.randint(k4, (B, L), 0, NUM_CLASSES + 1, jnp.int32)
    assigned_scores = jax.random.uniform(k5, (B, L, NUM_CLASSES), jnp.float32)
    assigned_scores_sum = jnp.maximum(assigned_scores.sum(), 1.0)

    out = jax.block_until_ready(
        bbox_loss_pallas(pred_dist, pred_bboxes, anchor_points, assigned_labels,
                         assigned_bboxes, assigned_scores, assigned_scores_sum))
    ref = bbox_loss_ref(pred_dist, pred_bboxes, anchor_points, assigned_labels,
                        assigned_bboxes, assigned_scores, assigned_scores_sum)

    # tolerance accounts for bf16-stored logits + approximate reciprocal in IoU
    for name, o, r in zip(("l1", "iou", "dfl"), out, ref):
        assert jnp.allclose(o, r, rtol=5e-3, atol=5e-3), (name, o, r)
    print("KERNEL_OK")
</pallas_src>

<mosaic_0001>
module attributes {stable_mosaic.version = 11 : i64} {
  func.func @_bbox_loss_kernel(%arg0: i32, %arg1: memref<2x7x2x128xf32, #tpu.memory_space<vmem>>, %arg2: memref<2x34x2x128xbf16, #tpu.memory_space<vmem>>, %arg3: memref<1x10x2x128xf32, #tpu.memory_space<vmem>>) attributes {dimension_semantics = [#tpu.dimension_semantics<parallel>], iteration_bounds = array<i64: 1>, scalar_prefetch = 0 : i64, scratch_operands = 0 : i64, tpu.core_type = #tpu.core_type<tc>, window_params = [{transform_indices = @transform_0, window_bounds = array<i64: 2, 7, 2, 128>}, {transform_indices = @transform_1, window_bounds = array<i64: 2, 34, 2, 128>}, {transform_indices = @transform_2, window_bounds = array<i64: 1, 10, 2, 128>}]} {
    %cst = arith.constant 0.000000e+00 : f32
    %0 = vector.broadcast %cst : f32 to vector<2x2x128xf32>
    %cst_0 = arith.constant 0.000000e+00 : f32
    %1 = vector.broadcast %cst_0 : f32 to vector<2x2x128xf32>
    %cst_1 = arith.constant 0.000000e+00 : f32
    %2 = vector.broadcast %cst_1 : f32 to vector<2x2x128xf32>
    %cst_2 = arith.constant 0.000000e+00 : f32
    %3 = vector.broadcast %cst_2 : f32 to vector<2x2x128xf32>
    %cst_3 = arith.constant 0.000000e+00 : f32
    %4 = vector.broadcast %cst_3 : f32 to vector<2x2x128xf32>
    %c0 = arith.constant 0 : index
    %c0_4 = arith.constant 0 : index
    %c0_5 = arith.constant 0 : index
    %c0_6 = arith.constant 0 : index
    %5 = vector.load %arg1[%c0, %c0_4, %c0_5, %c0_6] : memref<2x7x2x128xf32, #tpu.memory_space<vmem>>, vector<2x1x2x128xf32>
    %6 = vector.shape_cast %5 : vector<2x1x2x128xf32> to vector<2x2x128xf32>
    %c0_7 = arith.constant 0 : index
    %c1 = arith.constant 1 : index
    %c0_8 = arith.constant 0 : index
    %c0_9 = arith.constant 0 : index
    %7 = vector.load %arg1[%c0_7, %c1, %c0_8, %c0_9] : memref<2x7x2x128xf32, #tpu.memory_space<vmem>>, vector<2x1x2x128xf32>
    %8 = vector.shape_cast %7 : vector<2x1x2x128xf32> to vector<2x2x128xf32>
    %c0_10 = arith.constant 0 : index
    %c2 = arith.constant 2 : index
    %c0_11 = arith.constant 0 : index
    %c0_12 = arith.constant 0 : index
    %9 = vector.load %arg1[%c0_10, %c2, %c0_11, %c0_12] : memref<2x7x2x128xf32, #tpu.memory_space<vmem>>, vector<2x1x2x128xf32>
    %10 = vector.shape_cast %9 : vector<2x1x2x128xf32> to vector<2x2x128xf32>
    %c0_13 = arith.constant 0 : index
    %c3 = arith.constant 3 : index
    %c0_14 = arith.constant 0 : index
    %c0_15 = arith.constant 0 : index
    %11 = vector.load %arg1[%c0_13, %c3, %c0_14, %c0_15] : memref<2x7x2x128xf32, #tpu.memory_space<vmem>>, vector<2x1x2x128xf32>
    %12 = vector.shape_cast %11 : vector<2x1x2x128xf32> to vector<2x2x128xf32>
    %c0_16 = arith.constant 0 : index
    %c4 = arith.constant 4 : index
    %c0_17 = arith.constant 0 : index
    %c0_18 = arith.constant 0 : index
    %13 = vector.load %arg1[%c0_16, %c4, %c0_17, %c0_18] : memref<2x7x2x128xf32, #tpu.memory_space<vmem>>, vector<2x1x2x128xf32>
    %14 = vector.shape_cast %13 : vector<2x1x2x128xf32> to vector<2x2x128xf32>
    %c0_19 = arith.constant 0 : index
    %c5 = arith.constant 5 : index
    %c0_20 = arith.constant 0 : index
    %c0_21 = arith.constant 0 : index
    %15 = vector.load %arg1[%c0_19, %c5, %c0_20, %c0_21] : memref<2x7x2x128xf32, #tpu.memory_space<vmem>>, vector<2x1x2x128xf32>
    %16 = vector.shape_cast %15 : vector<2x1x2x128xf32> to vector<2x2x128xf32>
    %c0_22 = arith.constant 0 : index
    %c6 = arith.constant 6 : index
    %c0_23 = arith.constant 0 : index
    %c0_24 = arith.constant 0 : index
    %17 = vector.load %arg1[%c0_22, %c6, %c0_23, %c0_24] : memref<2x7x2x128xf32, #tpu.memory_space<vmem>>, vector<2x1x2x128xf32>
    %18 = vector.shape_cast %17 : vector<2x1x2x128xf32> to vector<2x2x128xf32>
    %19 = arith.subf %10, %14 : vector<2x2x128xf32>
    %20 = math.absf %19 : vector<2x2x128xf32>
    %21 = arith.subf %12, %16 : vector<2x2x128xf32>
    %22 = math.absf %21 : vector<2x2x128xf32>
    %23 = arith.addf %20, %22 : vector<2x2x128xf32>
    %24 = arith.mulf %23, %8 : vector<2x2x128xf32>
    %25 = arith.minimumf %12, %16 : vector<2x2x128xf32>
    %26 = arith.maximumf %10, %14 : vector<2x2x128xf32>
    %27 = arith.subf %25, %26 : vector<2x2x128xf32>
    %cst_25 = arith.constant 0.000000e+00 : f32
    %28 = vector.broadcast %cst_25 : f32 to vector<2x2x128xf32>
    %29 = arith.maximumf %27, %28 : vector<2x2x128xf32>
    %30 = arith.subf %12, %10 : vector<2x2x128xf32>
    %31 = arith.subf %16, %14 : vector<2x2x128xf32>
    %32 = arith.addf %30, %31 : vector<2x2x128xf32>
    %33 = arith.subf %32, %29 : vector<2x2x128xf32>
    %cst_26 = arith.constant 0.000000e+00 : f32
    %34 = vector.broadcast %cst_26 : f32 to vector<2x2x128xf32>
    %35 = arith.cmpf ogt, %8, %34 : vector<2x2x128xf32>
    %cst_27 = arith.constant 1.000000e+00 : f32
    %36 = vector.broadcast %cst_27 : f32 to vector<2x2x128xf32>
    %37 = arith.select %35, %33, %36 : vector<2x2x128xi1>, vector<2x2x128xf32>
    %38 = tpu.reciprocal %37 {approx = true} : vector<2x2x128xf32> -> vector<2x2x128xf32>
    %39 = arith.mulf %29, %38 : vector<2x2x128xf32>
    %cst_28 = arith.constant 1.000000e+00 : f32
    %40 = vector.broadcast %cst_28 : f32 to vector<2x2x128xf32>
    %41 = arith.subf %40, %39 : vector<2x2x128xf32>
    %42 = arith.mulf %41, %8 : vector<2x2x128xf32>
    %43 = arith.subf %18, %14 : vector<2x2x128xf32>
    %cst_29 = arith.constant 0.000000e+00 : f32
    %cst_30 = arith.constant 1.599000e+01 : f32
    %44 = vector.broadcast %cst_29 : f32 to vector<2x2x128xf32>
    %45 = arith.maximumf %44, %43 : vector<2x2x128xf32>
    %46 = vector.broadcast %cst_30 : f32 to vector<2x2x128xf32>
    %47 = arith.minimumf %46, %45 : vector<2x2x128xf32>
    %48 = arith.subf %16, %18 : vector<2x2x128xf32>
    %cst_31 = arith.constant 0.000000e+00 : f32
    %cst_32 = arith.constant 1.599000e+01 : f32
    %49 = vector.broadcast %cst_31 : f32 to vector<2x2x128xf32>
    %50 = arith.maximumf %49, %48 : vector<2x2x128xf32>
    %51 = vector.broadcast %cst_32 : f32 to vector<2x2x128xf32>
    %52 = arith.minimumf %51, %50 : vector<2x2x128xf32>
    %c0_33 = arith.constant 0 : index
    %c0_34 = arith.constant 0 : index
    %c0_35 = arith.constant 0 : index
    %c0_36 = arith.constant 0 : index
    %53 = vector.load %arg2[%c0_33, %c0_34, %c0_35, %c0_36] : memref<2x34x2x128xbf16, #tpu.memory_space<vmem>>, vector<2x1x2x128xbf16>
    %54 = vector.shape_cast %53 : vector<2x1x2x128xbf16> to vector<2x2x128xbf16>
    %55 = arith.extf %54 : vector<2x2x128xbf16> to vector<2x2x128xf32>
    %c0_37 = arith.constant 0 : index
    %c1_38 = arith.constant 1 : index
    %c0_39 = arith.constant 0 : index
    %c0_40 = arith.constant 0 : index
    %56 = vector.load %arg2[%c0_37, %c1_38, %c0_39, %c0_40] : memref<2x34x2x128xbf16, #tpu.memory_space<vmem>>, vector<2x1x2x128xbf16>
    %57 = vector.shape_cast %56 : vector<2x1x2x128xbf16> to vector<2x2x128xbf16>
    %58 = arith.extf %57 : vector<2x2x128xbf16> to vector<2x2x128xf32>
    %59 = arith.maximumf %55, %58 : vector<2x2x128xf32>
    %c0_41 = arith.constant 0 : index
    %c2_42 = arith.constant 2 : index
    %c0_43 = arith.constant 0 : index
    %c0_44 = arith.constant 0 : index
    %60 = vector.load %arg2[%c0_41, %c2_42, %c0_43, %c0_44] : memref<2x34x2x128xbf16, #tpu.memory_space<vmem>>, vector<2x1x2x128xbf16>
    %61 = vector.shape_cast %60 : vector<2x1x2x128xbf16> to vector<2x2x128xbf16>
    %62 = arith.extf %61 : vector<2x2x128xbf16> to vector<2x2x128xf32>
    %63 = arith.maximumf %59, %62 : vector<2x2x128xf32>
    %c0_45 = arith.constant 0 : index
    %c3_46 = arith.constant 3 : index
    %c0_47 = arith.constant 0 : index
    %c0_48 = arith.constant 0 : index
    %64 = vector.load %arg2[%c0_45, %c3_46, %c0_47, %c0_48] : memref<2x34x2x128xbf16, #tpu.memory_space<vmem>>, vector<2x1x2x128xbf16>
    %65 = vector.shape_cast %64 : vector<2x1x2x128xbf16> to vector<2x2x128xbf16>
    %66 = arith.extf %65 : vector<2x2x128xbf16> to vector<2x2x128xf32>
    %67 = arith.maximumf %63, %66 : vector<2x2x128xf32>
    %c0_49 = arith.constant 0 : index
    %c4_50 = arith.constant 4 : index
    %c0_51 = arith.constant 0 : index
    %c0_52 = arith.constant 0 : index
    %68 = vector.load %arg2[%c0_49, %c4_50, %c0_51, %c0_52] : memref<2x34x2x128xbf16, #tpu.memory_space<vmem>>, vector<2x1x2x128xbf16>
    %69 = vector.shape_cast %68 : vector<2x1x2x128xbf16> to vector<2x2x128xbf16>
    %70 = arith.extf %69 : vector<2x2x128xbf16> to vector<2x2x128xf32>
    %71 = arith.maximumf %67, %70 : vector<2x2x128xf32>
    %c0_53 = arith.constant 0 : index
    %c5_54 = arith.constant 5 : index
    %c0_55 = arith.constant 0 : index
    %c0_56 = arith.constant 0 : index
    %72 = vector.load %arg2[%c0_53, %c5_54, %c0_55, %c0_56] : memref<2x34x2x128xbf16, #tpu.memory_space<vmem>>, vector<2x1x2x128xbf16>
    %73 = vector.shape_cast %72 : vector<2x1x2x128xbf16> to vector<2x2x128xbf16>
    %74 = arith.extf %73 : vector<2x2x128xbf16> to vector<2x2x128xf32>
    %75 = arith.maximumf %71, %74 : vector<2x2x128xf32>
    %c0_57 = arith.constant 0 : index
    %c6_58 = arith.constant 6 : index
    %c0_59 = arith.constant 0 : index
    %c0_60 = arith.constant 0 : index
    %76 = vector.load %arg2[%c0_57, %c6_58, %c0_59, %c0_60] : memref<2x34x2x128xbf16, #tpu.memory_space<vmem>>, vector<2x1x2x128xbf16>
    %77 = vector.shape_cast %76 : vector<2x1x2x128xbf16> to vector<2x2x128xbf16>
    %78 = arith.extf %77 : vector<2x2x128xbf16> to vector<2x2x128xf32>
    %79 = arith.maximumf %75, %78 : vector<2x2x128xf32>
    %c0_61 = arith.constant 0 : index
    %c7 = arith.constant 7 : index
    %c0_62 = arith.constant 0 : index
    %c0_63 = arith.constant 0 : index
    %80 = vector.load %arg2[%c0_61, %c7, %c0_62, %c0_63] : memref<2x34x2x128xbf16, #tpu.memory_space<vmem>>, vector<2x1x2x128xbf16>
    %81 = vector.shape_cast %80 : vector<2x1x2x128xbf16> to vector<2x2x128xbf16>
    %82 = arith.extf %81 : vector<2x2x128xbf16> to vector<2x2x128xf32>
    %83 = arith.maximumf %79, %82 : vector<2x2x128xf32>
    %c0_64 = arith.constant 0 : index
    %c8 = arith.constant 8 : index
    %c0_65 = arith.constant 0 : index
    %c0_66 = arith.constant 0 : index
    %84 = vector.load %arg2[%c0_64, %c8, %c0_65, %c0_66] : memref<2x34x2x128xbf16, #tpu.memory_space<vmem>>, vector<2x1x2x128xbf16>
    %85 = vector.shape_cast %84 : vector<2x1x2x128xbf16> to vector<2x2x128xbf16>
    %86 = arith.extf %85 : vector<2x2x128xbf16> to vector<2x2x128xf32>
    %87 = arith.maximumf %83, %86 : vector<2x2x128xf32>
    %c0_67 = arith.constant 0 : index
    %c9 = arith.constant 9 : index
    %c0_68 = arith.constant 0 : index
    %c0_69 = arith.constant 0 : index
    %88 = vector.load %arg2[%c0_67, %c9, %c0_68, %c0_69] : memref<2x34x2x128xbf16, #tpu.memory_space<vmem>>, vector<2x1x2x128xbf16>
    %89 = vector.shape_cast %88 : vector<2x1x2x128xbf16> to vector<2x2x128xbf16>
    %90 = arith.extf %89 : vector<2x2x128xbf16> to vector<2x2x128xf32>
    %91 = arith.maximumf %87, %90 : vector<2x2x128xf32>
    %c0_70 = arith.constant 0 : index
    %c10 = arith.constant 10 : index
    %c0_71 = arith.constant 0 : index
    %c0_72 = arith.constant 0 : index
    %92 = vector.load %arg2[%c0_70, %c10, %c0_71, %c0_72] : memref<2x34x2x128xbf16, #tpu.memory_space<vmem>>, vector<2x1x2x128xbf16>
    %93 = vector.shape_cast %92 : vector<2x1x2x128xbf16> to vector<2x2x128xbf16>
    %94 = arith.extf %93 : vector<2x2x128xbf16> to vector<2x2x128xf32>
    %95 = arith.maximumf %91, %94 : vector<2x2x128xf32>
    %c0_73 = arith.constant 0 : index
    %c11 = arith.constant 11 : index
    %c0_74 = arith.constant 0 : index
    %c0_75 = arith.constant 0 : index
    %96 = vector.load %arg2[%c0_73, %c11, %c0_74, %c0_75] : memref<2x34x2x128xbf16, #tpu.memory_space<vmem>>, vector<2x1x2x128xbf16>
    %97 = vector.shape_cast %96 : vector<2x1x2x128xbf16> to vector<2x2x128xbf16>
    %98 = arith.extf %97 : vector<2x2x128xbf16> to vector<2x2x128xf32>
    %99 = arith.maximumf %95, %98 : vector<2x2x128xf32>
    %c0_76 = arith.constant 0 : index
    %c12 = arith.constant 12 : index
    %c0_77 = arith.constant 0 : index
    %c0_78 = arith.constant 0 : index
    %100 = vector.load %arg2[%c0_76, %c12, %c0_77, %c0_78] : memref<2x34x2x128xbf16, #tpu.memory_space<vmem>>, vector<2x1x2x128xbf16>
    %101 = vector.shape_cast %100 : vector<2x1x2x128xbf16> to vector<2x2x128xbf16>
    %102 = arith.extf %101 : vector<2x2x128xbf16> to vector<2x2x128xf32>
    %103 = arith.maximumf %99, %102 : vector<2x2x128xf32>
    %c0_79 = arith.constant 0 : index
    %c13 = arith.constant 13 : index
    %c0_80 = arith.constant 0 : index
    %c0_81 = arith.constant 0 : index
    %104 = vector.load %arg2[%c0_79, %c13, %c0_80, %c0_81] : memref<2x34x2x128xbf16, #tpu.memory_space<vmem>>, vector<2x1x2x128xbf16>
    %105 = vector.shape_cast %104 : vector<2x1x2x128xbf16> to vector<2x2x128xbf16>
    %106 = arith.extf %105 : vector<2x2x128xbf16> to vector<2x2x128xf32>
    %107 = arith.maximumf %103, %106 : vector<2x2x128xf32>
    %c0_82 = arith.constant 0 : index
    %c14 = arith.constant 14 : index
    %c0_83 = arith.constant 0 : index
    %c0_84 = arith.constant 0 : index
    %108 = vector.load %arg2[%c0_82, %c14, %c0_83, %c0_84] : memref<2x34x2x128xbf16, #tpu.memory_space<vmem>>, vector<2x1x2x128xbf16>
    %109 = vector.shape_cast %108 : vector<2x1x2x128xbf16> to vector<2x2x128xbf16>
    %110 = arith.extf %109 : vector<2x2x128xbf16> to vector<2x2x128xf32>
    %111 = arith.maximumf %107, %110 : vector<2x2x128xf32>
    %c0_85 = arith.constant 0 : index
    %c15 = arith.constant 15 : index
    %c0_86 = arith.constant 0 : index
    %c0_87 = arith.constant 0 : index
    %112 = vector.load %arg2[%c0_85, %c15, %c0_86, %c0_87] : memref<2x34x2x128xbf16, #tpu.memory_space<vmem>>, vector<2x1x2x128xbf16>
    %113 = vector.shape_cast %112 : vector<2x1x2x128xbf16> to vector<2x2x128xbf16>
    %114 = arith.extf %113 : vector<2x2x128xbf16> to vector<2x2x128xf32>
    %115 = arith.maximumf %111, %114 : vector<2x2x128xf32>
    %c0_88 = arith.constant 0 : index
    %c16 = arith.constant 16 : index
    %c0_89 = arith.constant 0 : index
    %c0_90 = arith.constant 0 : index
    %116 = vector.load %arg2[%c0_88, %c16, %c0_89, %c0_90] : memref<2x34x2x128xbf16, #tpu.memory_space<vmem>>, vector<2x1x2x128xbf16>
    %117 = vector.shape_cast %116 : vector<2x1x2x128xbf16> to vector<2x2x128xbf16>
    %118 = arith.extf %117 : vector<2x2x128xbf16> to vector<2x2x128xf32>
    %119 = arith.maximumf %115, %118 : vector<2x2x128xf32>
    %cst_91 = arith.constant 0.000000e+00 : f32
    %120 = vector.broadcast %cst_91 : f32 to vector<2x2x128xf32>
    %cst_92 = arith.constant 0.000000e+00 : f32
    %121 = vector.broadcast %cst_92 : f32 to vector<2x2x128xf32>
    %c0_93 = arith.constant 0 : index
    %c0_94 = arith.constant 0 : index
    %c0_95 = arith.constant 0 : index
    %c0_96 = arith.constant 0 : index
    %122 = vector.load %arg2[%c0_93, %c0_94, %c0_95, %c0_96] : memref<2x34x2x128xbf16, #tpu.memory_space<vmem>>, vector<2x1x2x128xbf16>
    %123 = vector.shape_cast %122 : vector<2x1x2x128xbf16> to vector<2x2x128xbf16>
    %124 = arith.extf %123 : vector<2x2x128xbf16> to vector<2x2x128xf32>
    %125 = arith.subf %124, %119 : vector<2x2x128xf32>
    %126 = math.exp %125 : vector<2x2x128xf32>
    %127 = arith.addf %120, %126 : vector<2x2x128xf32>
    %cst_97 = arith.constant 0.000000e+00 : f32
    %128 = vector.broadcast %cst_97 : f32 to vector<2x2x128xf32>
    %129 = arith.subf %47, %128 : vector<2x2x128xf32>
    %130 = math.absf %129 : vector<2x2x128xf32>
    %cst_98 = arith.constant 1.000000e+00 : f32
    %131 = vector.broadcast %cst_98 : f32 to vector<2x2x128xf32>
    %132 = arith.subf %131, %130 : vector<2x2x128xf32>
    %cst_99 = arith.constant 0.000000e+00 : f32
    %133 = vector.broadcast %cst_99 : f32 to vector<2x2x128xf32>
    %134 = arith.maximumf %132, %133 : vector<2x2x128xf32>
    %135 = arith.mulf %124, %134 : vector<2x2x128xf32>
    %136 = arith.addf %121, %135 : vector<2x2x128xf32>
    %c0_100 = arith.constant 0 : index
    %c1_101 = arith.constant 1 : index
    %c0_102 = arith.constant 0 : index
    %c0_103 = arith.constant 0 : index
    %137 = vector.load %arg2[%c0_100, %c1_101, %c0_102, %c0_103] : memref<2x34x2x128xbf16, #tpu.memory_space<vmem>>, vector<2x1x2x128xbf16>
    %138 = vector.shape_cast %137 : vector<2x1x2x128xbf16> to vector<2x2x128xbf16>
    %139 = arith.extf %138 : vector<2x2x128xbf16> to vector<2x2x128xf32>
    %140 = arith.subf %139, %119 : vector<2x2x128xf32>
    %141 = math.exp %140 : vector<2x2x128xf32>
    %142 = arith.addf %127, %141 : vector<2x2x128xf32>
    %cst_104 = arith.constant 1.000000e+00 : f32
    %143 = vector.broadcast %cst_104 : f32 to vector<2x2x128xf32>
    %144 = arith.subf %47, %143 : vector<2x2x128xf32>
    %145 = math.absf %144 : vector<2x2x128xf32>
    %cst_105 = arith.constant 1.000000e+00 : f32
    %146 = vector.broadcast %cst_105 : f32 to vector<2x2x128xf32>
    %147 = arith.subf %146, %145 : vector<2x2x128xf32>
    %cst_106 = arith.constant 0.000000e+00 : f32
    %148 = vector.broadcast %cst_106 : f32 to vector<2x2x128xf32>
    %149 = arith.maximumf %147, %148 : vector<2x2x128xf32>
    %150 = arith.mulf %139, %149 : vector<2x2x128xf32>
    %151 = arith.addf %136, %150 : vector<2x2x128xf32>
    %c0_107 = arith.constant 0 : index
    %c2_108 = arith.constant 2 : index
    %c0_109 = arith.constant 0 : index
    %c0_110 = arith.constant 0 : index
    %152 = vector.load %arg2[%c0_107, %c2_108, %c0_109, %c0_110] : memref<2x34x2x128xbf16, #tpu.memory_space<vmem>>, vector<2x1x2x128xbf16>
    %153 = vector.shape_cast %152 : vector<2x1x2x128xbf16> to vector<2x2x128xbf16>
    %154 = arith.extf %153 : vector<2x2x128xbf16> to vector<2x2x128xf32>
    %155 = arith.subf %154, %119 : vector<2x2x128xf32>
    %156 = math.exp %155 : vector<2x2x128xf32>
    %157 = arith.addf %142, %156 : vector<2x2x128xf32>
    %cst_111 = arith.constant 2.000000e+00 : f32
    %158 = vector.broadcast %cst_111 : f32 to vector<2x2x128xf32>
    %159 = arith.subf %47, %158 : vector<2x2x128xf32>
    %160 = math.absf %159 : vector<2x2x128xf32>
    %cst_112 = arith.constant 1.000000e+00 : f32
    %161 = vector.broadcast %cst_112 : f32 to vector<2x2x128xf32>
    %162 = arith.subf %161, %160 : vector<2x2x128xf32>
    %cst_113 = arith.constant 0.000000e+00 : f32
    %163 = vector.broadcast %cst_113 : f32 to vector<2x2x128xf32>
    %164 = arith.maximumf %162, %163 : vector<2x2x128xf32>
    %165 = arith.mulf %154, %164 : vector<2x2x128xf32>
    %166 = arith.addf %151, %165 : vector<2x2x128xf32>
    %c0_114 = arith.constant 0 : index
    %c3_115 = arith.constant 3 : index
    %c0_116 = arith.constant 0 : index
    %c0_117 = arith.constant 0 : index
    %167 = vector.load %arg2[%c0_114, %c3_115, %c0_116, %c0_117] : memref<2x34x2x128xbf16, #tpu.memory_space<vmem>>, vector<2x1x2x128xbf16>
    %168 = vector.shape_cast %167 : vector<2x1x2x128xbf16> to vector<2x2x128xbf16>
    %169 = arith.extf %168 : vector<2x2x128xbf16> to vector<2x2x128xf32>
    %170 = arith.subf %169, %119 : vector<2x2x128xf32>
    %171 = math.exp %170 : vector<2x2x128xf32>
    %172 = arith.addf %157, %171 : vector<2x2x128xf32>
    %cst_118 = arith.constant 3.000000e+00 : f32
    %173 = vector.broadcast %cst_118 : f32 to vector<2x2x128xf32>
    %174 = arith.subf %47, %173 : vector<2x2x128xf32>
    %175 = math.absf %174 : vector<2x2x128xf32>
    %cst_119 = arith.constant 1.000000e+00 : f32
    %176 = vector.broadcast %cst_119 : f32 to vector<2x2x128xf32>
    %177 = arith.subf %176, %175 : vector<2x2x128xf32>
    %cst_120 = arith.constant 0.000000e+00 : f32
    %178 = vector.broadcast %cst_120 : f32 to vector<2x2x128xf32>
    %179 = arith.maximumf %177, %178 : vector<2x2x128xf32>
    %180 = arith.mulf %169, %179 : vector<2x2x128xf32>
    %181 = arith.addf %166, %180 : vector<2x2x128xf32>
    %c0_121 = arith.constant 0 : index
    %c4_122 = arith.constant 4 : index
    %c0_123 = arith.constant 0 : index
    %c0_124 = arith.constant 0 : index
    %182 = vector.load %arg2[%c0_121, %c4_122, %c0_123, %c0_124] : memref<2x34x2x128xbf16, #tpu.memory_space<vmem>>, vector<2x1x2x128xbf16>
    %183 = vector.shape_cast %182 : vector<2x1x2x128xbf16> to vector<2x2x128xbf16>
    %184 = arith.extf %183 : vector<2x2x128xbf16> to vector<2x2x128xf32>
    %185 = arith.subf %184, %119 : vector<2x2x128xf32>
    %186 = math.exp %185 : vector<2x2x128xf32>
    %187 = arith.addf %172, %186 : vector<2x2x128xf32>
    %cst_125 = arith.constant 4.000000e+00 : f32
    %188 = vector.broadcast %cst_125 : f32 to vector<2x2x128xf32>
    %189 = arith.subf %47, %188 : vector<2x2x128xf32>
    %190 = math.absf %189 : vector<2x2x128xf32>
    %cst_126 = arith.constant 1.000000e+00 : f32
    %191 = vector.broadcast %cst_126 : f32 to vector<2x2x128xf32>
    %192 = arith.subf %191, %190 : vector<2x2x128xf32>
    %cst_127 = arith.constant 0.000000e+00 : f32
    %193 = vector.broadcast %cst_127 : f32 to vector<2x2x128xf32>
    %194 = arith.maximumf %192, %193 : vector<2x2x128xf32>
    %195 = arith.mulf %184, %194 : vector<2x2x128xf32>
    %196 = arith.addf %181, %195 : vector<2x2x128xf32>
    %c0_128 = arith.constant 0 : index
    %c5_129 = arith.constant 5 : index
    %c0_130 = arith.constant 0 : index
    %c0_131 = arith.constant 0 : index
    %197 = vector.load %arg2[%c0_128, %c5_129, %c0_130, %c0_131] : memref<2x34x2x128xbf16, #tpu.memory_space<vmem>>, vector<2x1x2x128xbf16>
    %198 = vector.shape_cast %197 : vector<2x1x2x128xbf16> to vector<2x2x128xbf16>
    %199 = arith.extf %198 : vector<2x2x128xbf16> to vector<2x2x128xf32>
    %200 = arith.subf %199, %119 : vector<2x2x128xf32>
    %201 = math.exp %200 : vector<2x2x128xf32>
    %202 = arith.addf %187, %201 : vector<2x2x128xf32>
    %cst_132 = arith.constant 5.000000e+00 : f32
    %203 = vector.broadcast %cst_132 : f32 to vector<2x2x128xf32>
    %204 = arith.subf %47, %203 : vector<2x2x128xf32>
    %205 = math.absf %204 : vector<2x2x128xf32>
    %cst_133 = arith.constant 1.000000e+00 : f32
    %206 = vector.broadcast %cst_133 : f32 to vector<2x2x128xf32>
    %207 = arith.subf %206, %205 : vector<2x2x128xf32>
    %cst_134 = arith.constant 0.000000e+00 : f32
    %208 = vector.broadcast %cst_134 : f32 to vector<2x2x128xf32>
    %209 = arith.maximumf %207, %208 : vector<2x2x128xf32>
    %210 = arith.mulf %199, %209 : vector<2x2x128xf32>
    %211 = arith.addf %196, %210 : vector<2x2x128xf32>
    %c0_135 = arith.constant 0 : index
    %c6_136 = arith.constant 6 : index
    %c0_137 = arith.constant 0 : index
    %c0_138 = arith.constant 0 : index
    %212 = vector.load %arg2[%c0_135, %c6_136, %c0_137, %c0_138] : memref<2x34x2x128xbf16, #tpu.memory_space<vmem>>, vector<2x1x2x128xbf16>
    %213 = vector.shape_cast %212 : vector<2x1x2x128xbf16> to vector<2x2x128xbf16>
    %214 = arith.extf %213 : vector<2x2x128xbf16> to vector<2x2x128xf32>
    %215 = arith.subf %214, %119 : vector<2x2x128xf32>
    %216 = math.exp %215 : vector<2x2x128xf32>
    %217 = arith.addf %202, %216 : vector<2x2x128xf32>
    %cst_139 = arith.constant 6.000000e+00 : f32
    %218 = vector.broadcast %cst_139 : f32 to vector<2x2x128xf32>
    %219 = arith.subf %47, %218 : vector<2x2x128xf32>
    %220 = math.absf %219 : vector<2x2x128xf32>
    %cst_140 = arith.constant 1.000000e+00 : f32
    %221 = vector.broadcast %cst_140 : f32 to vector<2x2x128xf32>
    %222 = arith.subf %221, %220 : vector<2x2x128xf32>
    %cst_141 = arith.constant 0.000000e+00 : f32
    %223 = vector.broadcast %cst_141 : f32 to vector<2x2x128xf32>
    %224 = arith.maximumf %222, %223 : vector<2x2x128xf32>
    %225 = arith.mulf %214, %224 : vector<2x2x128xf32>
    %226 = arith.addf %211, %225 : vector<2x2x128xf32>
    %c0_142 = arith.constant 0 : index
    %c7_143 = arith.constant 7 : index
    %c0_144 = arith.constant 0 : index
    %c0_145 = arith.constant 0 : index
    %227 = vector.load %arg2[%c0_142, %c7_143, %c0_144, %c0_145] : memref<2x34x2x128xbf16, #tpu.memory_space<vmem>>, vector<2x1x2x128xbf16>
    %228 = vector.shape_cast %227 : vector<2x1x2x128xbf16> to vector<2x2x128xbf16>
    %229 = arith.extf %228 : vector<2x2x128xbf16> to vector<2x2x128xf32>
    %230 = arith.subf %229, %119 : vector<2x2x128xf32>
    %231 = math.exp %230 : vector<2x2x128xf32>
    %232 = arith.addf %217, %231 : vector<2x2x128xf32>
    %cst_146 = arith.constant 7.000000e+00 : f32
    %233 = vector.broadcast %cst_146 : f32 to vector<2x2x128xf32>
    %234 = arith.subf %47, %233 : vector<2x2x128xf32>
    %235 = math.absf %234 : vector<2x2x128xf32>
    %cst_147 = arith.constant 1.000000e+00 : f32
    %236 = vector.broadcast %cst_147 : f32 to vector<2x2x128xf32>
    %237 = arith.subf %236, %235 : vector<2x2x128xf32>
    %cst_148 = arith.constant 0.000000e+00 : f32
    %238 = vector.broadcast %cst_148 : f32 to vector<2x2x128xf32>
    %239 = arith.maximumf %237, %238 : vector<2x2x128xf32>
    %240 = arith.mulf %229, %239 : vector<2x2x128xf32>
    %241 = arith.addf %226, %240 : vector<2x2x128xf32>
    %c0_149 = arith.constant 0 : index
    %c8_150 = arith.constant 8 : index
    %c0_151 = arith.constant 0 : index
    %c0_152 = arith.constant 0 : index
    %242 = vector.load %arg2[%c0_149, %c8_150, %c0_151, %c0_152] : memref<2x34x2x128xbf16, #tpu.memory_space<vmem>>, vector<2x1x2x128xbf16>
    %243 = vector.shape_cast %242 : vector<2x1x2x128xbf16> to vector<2x2x128xbf16>
    %244 = arith.extf %243 : vector<2x2x128xbf16> to vector<2x2x128xf32>
    %245 = arith.subf %244, %119 : vector<2x2x128xf32>
    %246 = math.exp %245 : vector<2x2x128xf32>
    %247 = arith.addf %232, %246 : vector<2x2x128xf32>
    %cst_153 = arith.constant 8.000000e+00 : f32
    %248 = vector.broadcast %cst_153 : f32 to vector<2x2x128xf32>
    %249 = arith.subf %47, %248 : vector<2x2x128xf32>
    %250 = math.absf %249 : vector<2x2x128xf32>
    %cst_154 = arith.constant 1.000000e+00 : f32
    %251 = vector.broadcast %cst_154 : f32 to vector<2x2x128xf32>
    %252 = arith.subf %251, %250 : vector<2x2x128xf32>
    %cst_155 = arith.constant 0.000000e+00 : f32
    %253 = vector.broadcast %cst_155 : f32 to vector<2x2x128xf32>
    %254 = arith.maximumf %252, %253 : vector<2x2x128xf32>
    %255 = arith.mulf %244, %254 : vector<2x2x128xf32>
    %256 = arith.addf %241, %255 : vector<2x2x128xf32>
    %c0_156 = arith.constant 0 : index
    %c9_157 = arith.constant 9 : index
    %c0_158 = arith.constant 0 : index
    %c0_159 = arith.constant 0 : index
    %257 = vector.load %arg2[%c0_156, %c9_157, %c0_158, %c0_159] : memref<2x34x2x128xbf16, #tpu.memory_space<vmem>>, vector<2x1x2x128xbf16>
    %258 = vector.shape_cast %257 : vector<2x1x2x128xbf16> to vector<2x2x128xbf16>
    %259 = arith.extf %258 : vector<2x2x128xbf16> to vector<2x2x128xf32>
    %260 = arith.subf %259, %119 : vector<2x2x128xf32>
    %261 = math.exp %260 : vector<2x2x128xf32>
    %262 = arith.addf %247, %261 : vector<2x2x128xf32>
    %cst_160 = arith.constant 9.000000e+00 : f32
    %263 = vector.broadcast %cst_160 : f32 to vector<2x2x128xf32>
    %264 = arith.subf %47, %263 : vector<2x2x128xf32>
    %265 = math.absf %264 : vector<2x2x128xf32>
    %cst_161 = arith.constant 1.000000e+00 : f32
    %266 = vector.broadcast %cst_161 : f32 to vector<2x2x128xf32>
    %267 = arith.subf %266, %265 : vector<2x2x128xf32>
    %cst_162 = arith.constant 0.000000e+00 : f32
    %268 = vector.broadcast %cst_162 : f32 to vector<2x2x128xf32>
    %269 = arith.maximumf %267, %268 : vector<2x2x128xf32>
    %270 = arith.mulf %259, %269 : vector<2x2x128xf32>
    %271 = arith.addf %256, %270 : vector<2x2x128xf32>
    %c0_163 = arith.constant 0 : index
    %c10_164 = arith.constant 10 : index
    %c0_165 = arith.constant 0 : index
    %c0_166 = arith.constant 0 : index
    %272 = vector.load %arg2[%c0_163, %c10_164, %c0_165, %c0_166] : memref<2x34x2x128xbf16, #tpu.memory_space<vmem>>, vector<2x1x2x128xbf16>
    %273 = vector.shape_cast %272 : vector<2x1x2x128xbf16> to vector<2x2x128xbf16>
    %274 = arith.extf %273 : vector<2x2x128xbf16> to vector<2x2x128xf32>
    %275 = arith.subf %274, %119 : vector<2x2x128xf32>
    %276 = math.exp %275 : vector<2x2x128xf32>
    %277 = arith.addf %262, %276 : vector<2x2x128xf32>
    %cst_167 = arith.constant 1.000000e+01 : f32
    %278 = vector.broadcast %cst_167 : f32 to vector<2x2x128xf32>
    %279 = arith.subf %47, %278 : vector<2x2x128xf32>
    %280 = math.absf %279 : vector<2x2x128xf32>
    %cst_168 = arith.constant 1.000000e+00 : f32
    %281 = vector.broadcast %cst_168 : f32 to vector<2x2x128xf32>
    %282 = arith.subf %281, %280 : vector<2x2x128xf32>
    %cst_169 = arith.constant 0.000000e+00 : f32
    %283 = vector.broadcast %cst_169 : f32 to vector<2x2x128xf32>
    %284 = arith.maximumf %282, %283 : vector<2x2x128xf32>
    %285 = arith.mulf %274, %284 : vector<2x2x128xf32>
    %286 = arith.addf %271, %285 : vector<2x2x128xf32>
    %c0_170 = arith.constant 0 : index
    %c11_171 = arith.constant 11 : index
    %c0_172 = arith.constant 0 : index
    %c0_173 = arith.constant 0 : index
    %287 = vector.load %arg2[%c0_170, %c11_171, %c0_172, %c0_173] : memref<2x34x2x128xbf16, #tpu.memory_space<vmem>>, vector<2x1x2x128xbf16>
    %288 = vector.shape_cast %287 : vector<2x1x2x128xbf16> to vector<2x2x128xbf16>
    %289 = arith.extf %288 : vector<2x2x128xbf16> to vector<2x2x128xf32>
    %290 = arith.subf %289, %119 : vector<2x2x128xf32>
    %291 = math.exp %290 : vector<2x2x128xf32>
    %292 = arith.addf %277, %291 : vector<2x2x128xf32>
    %cst_174 = arith.constant 1.100000e+01 : f32
    %293 = vector.broadcast %cst_174 : f32 to vector<2x2x128xf32>
    %294 = arith.subf %47, %293 : vector<2x2x128xf32>
    %295 = math.absf %294 : vector<2x2x128xf32>
    %cst_175 = arith.constant 1.000000e+00 : f32
    %296 = vector.broadcast %cst_175 : f32 to vector<2x2x128xf32>
    %297 = arith.subf %296, %295 : vector<2x2x128xf32>
    %cst_176 = arith.constant 0.000000e+00 : f32
    %298 = vector.broadcast %cst_176 : f32 to vector<2x2x128xf32>
    %299 = arith.maximumf %297, %298 : vector<2x2x128xf32>
    %300 = arith.mulf %289, %299 : vector<2x2x128xf32>
    %301 = arith.addf %286, %300 : vector<2x2x128xf32>
    %c0_177 = arith.constant 0 : index
    %c12_178 = arith.constant 12 : index
    %c0_179 = arith.constant 0 : index
    %c0_180 = arith.constant 0 : index
    %302 = vector.load %arg2[%c0_177, %c12_178, %c0_179, %c0_180] : memref<2x34x2x128xbf16, #tpu.memory_space<vmem>>, vector<2x1x2x128xbf16>
    %303 = vector.shape_cast %302 : vector<2x1x2x128xbf16> to vector<2x2x128xbf16>
    %304 = arith.extf %303 : vector<2x2x128xbf16> to vector<2x2x128xf32>
    %305 = arith.subf %304, %119 : vector<2x2x128xf32>
    %306 = math.exp %305 : vector<2x2x128xf32>
    %307 = arith.addf %292, %306 : vector<2x2x128xf32>
    %cst_181 = arith.constant 1.200000e+01 : f32
    %308 = vector.broadcast %cst_181 : f32 to vector<2x2x128xf32>
    %309 = arith.subf %47, %308 : vector<2x2x128xf32>
    %310 = math.absf %309 : vector<2x2x128xf32>
    %cst_182 = arith.constant 1.000000e+00 : f32
    %311 = vector.broadcast %cst_182 : f32 to vector<2x2x128xf32>
    %312 = arith.subf %311, %310 : vector<2x2x128xf32>
    %cst_183 = arith.constant 0.000000e+00 : f32
    %313 = vector.broadcast %cst_183 : f32 to vector<2x2x128xf32>
    %314 = arith.maximumf %312, %313 : vector<2x2x128xf32>
    %315 = arith.mulf %304, %314 : vector<2x2x128xf32>
    %316 = arith.addf %301, %315 : vector<2x2x128xf32>
    %c0_184 = arith.constant 0 : index
    %c13_185 = arith.constant 13 : index
    %c0_186 = arith.constant 0 : index
    %c0_187 = arith.constant 0 : index
    %317 = vector.load %arg2[%c0_184, %c13_185, %c0_186, %c0_187] : memref<2x34x2x128xbf16, #tpu.memory_space<vmem>>, vector<2x1x2x128xbf16>
    %318 = vector.shape_cast %317 : vector<2x1x2x128xbf16> to vector<2x2x128xbf16>
    %319 = arith.extf %318 : vector<2x2x128xbf16> to vector<2x2x128xf32>
    %320 = arith.subf %319, %119 : vector<2x2x128xf32>
    %321 = math.exp %320 : vector<2x2x128xf32>
    %322 = arith.addf %307, %321 : vector<2x2x128xf32>
    %cst_188 = arith.constant 1.300000e+01 : f32
    %323 = vector.broadcast %cst_188 : f32 to vector<2x2x128xf32>
    %324 = arith.subf %47, %323 : vector<2x2x128xf32>
    %325 = math.absf %324 : vector<2x2x128xf32>
    %cst_189 = arith.constant 1.000000e+00 : f32
    %326 = vector.broadcast %cst_189 : f32 to vector<2x2x128xf32>
    %327 = arith.subf %326, %325 : vector<2x2x128xf32>
    %cst_190 = arith.constant 0.000000e+00 : f32
    %328 = vector.broadcast %cst_190 : f32 to vector<2x2x128xf32>
    %329 = arith.maximumf %327, %328 : vector<2x2x128xf32>
    %330 = arith.mulf %319, %329 : vector<2x2x128xf32>
    %331 = arith.addf %316, %330 : vector<2x2x128xf32>
    %c0_191 = arith.constant 0 : index
    %c14_192 = arith.constant 14 : index
    %c0_193 = arith.constant 0 : index
    %c0_194 = arith.constant 0 : index
    %332 = vector.load %arg2[%c0_191, %c14_192, %c0_193, %c0_194] : memref<2x34x2x128xbf16, #tpu.memory_space<vmem>>, vector<2x1x2x128xbf16>
    %333 = vector.shape_cast %332 : vector<2x1x2x128xbf16> to vector<2x2x128xbf16>
    %334 = arith.extf %333 : vector<2x2x128xbf16> to vector<2x2x128xf32>
    %335 = arith.subf %334, %119 : vector<2x2x128xf32>
    %336 = math.exp %335 : vector<2x2x128xf32>
    %337 = arith.addf %322, %336 : vector<2x2x128xf32>
    %cst_195 = arith.constant 1.400000e+01 : f32
    %338 = vector.broadcast %cst_195 : f32 to vector<2x2x128xf32>
    %339 = arith.subf %47, %338 : vector<2x2x128xf32>
    %340 = math.absf %339 : vector<2x2x128xf32>
    %cst_196 = arith.constant 1.000000e+00 : f32
    %341 = vector.broadcast %cst_196 : f32 to vector<2x2x128xf32>
    %342 = arith.subf %341, %340 : vector<2x2x128xf32>
    %cst_197 = arith.constant 0.000000e+00 : f32
    %343 = vector.broadcast %cst_197 : f32 to vector<2x2x128xf32>
    %344 = arith.maximumf %342, %343 : vector<2x2x128xf32>
    %345 = arith.mulf %334, %344 : vector<2x2x128xf32>
    %346 = arith.addf %331, %345 : vector<2x2x128xf32>
    %c0_198 = arith.constant 0 : index
    %c15_199 = arith.constant 15 : index
    %c0_200 = arith.constant 0 : index
    %c0_201 = arith.constant 0 : index
    %347 = vector.load %arg2[%c0_198, %c15_199, %c0_200, %c0_201] : memref<2x34x2x128xbf16, #tpu.memory_space<vmem>>, vector<2x1x2x128xbf16>
    %348 = vector.shape_cast %347 : vector<2x1x2x128xbf16> to vector<2x2x128xbf16>
    %349 = arith.extf %348 : vector<2x2x128xbf16> to vector<2x2x128xf32>
    %350 = arith.subf %349, %119 : vector<2x2x128xf32>
    %351 = math.exp %350 : vector<2x2x128xf32>
    %352 = arith.addf %337, %351 : vector<2x2x128xf32>
    %cst_202 = arith.constant 1.500000e+01 : f32
    %353 = vector.broadcast %cst_202 : f32 to vector<2x2x128xf32>
    %354 = arith.subf %47, %353 : vector<2x2x128xf32>
    %355 = math.absf %354 : vector<2x2x128xf32>
    %cst_203 = arith.constant 1.000000e+00 : f32
    %356 = vector.broadcast %cst_203 : f32 to vector<2x2x128xf32>
    %357 = arith.subf %356, %355 : vector<2x2x128xf32>
    %cst_204 = arith.constant 0.000000e+00 : f32
    %358 = vector.broadcast %cst_204 : f32 to vector<2x2x128xf32>
    %359 = arith.maximumf %357, %358 : vector<2x2x128xf32>
    %360 = arith.mulf %349, %359 : vector<2x2x128xf32>
    %361 = arith.addf %346, %360 : vector<2x2x128xf32>
    %c0_205 = arith.constant 0 : index
    %c16_206 = arith.constant 16 : index
    %c0_207 = arith.constant 0 : index
    %c0_208 = arith.constant 0 : index
    %362 = vector.load %arg2[%c0_205, %c16_206, %c0_207, %c0_208] : memref<2x34x2x128xbf16, #tpu.memory_space<vmem>>, vector<2x1x2x128xbf16>
    %363 = vector.shape_cast %362 : vector<2x1x2x128xbf16> to vector<2x2x128xbf16>
    %364 = arith.extf %363 : vector<2x2x128xbf16> to vector<2x2x128xf32>
    %365 = arith.subf %364, %119 : vector<2x2x128xf32>
    %366 = math.exp %365 : vector<2x2x128xf32>
    %367 = arith.addf %352, %366 : vector<2x2x128xf32>
    %cst_209 = arith.constant 1.600000e+01 : f32
    %368 = vector.broadcast %cst_209 : f32 to vector<2x2x128xf32>
    %369 = arith.subf %47, %368 : vector<2x2x128xf32>
    %370 = math.absf %369 : vector<2x2x128xf32>
    %cst_210 = arith.constant 1.000000e+00 : f32
    %371 = vector.broadcast %cst_210 : f32 to vector<2x2x128xf32>
    %372 = arith.subf %371, %370 : vector<2x2x128xf32>
    %cst_211 = arith.constant 0.000000e+00 : f32
    %373 = vector.broadcast %cst_211 : f32 to vector<2x2x128xf32>
    %374 = arith.maximumf %372, %373 : vector<2x2x128xf32>
    %375 = arith.mulf %364, %374 : vector<2x2x128xf32>
    %376 = arith.addf %361, %375 : vector<2x2x128xf32>
    %377 = math.log %367 : vector<2x2x128xf32>
    %378 = arith.addf %119, %377 : vector<2x2x128xf32>
    %379 = arith.subf %378, %376 : vector<2x2x128xf32>
    %c0_212 = arith.constant 0 : index
    %c17 = arith.constant 17 : index
    %c0_213 = arith.constant 0 : index
    %c0_214 = arith.constant 0 : index
    %380 = vector.load %arg2[%c0_212, %c17, %c0_213, %c0_214] : memref<2x34x2x128xbf16, #tpu.memory_space<vmem>>, vector<2x1x2x128xbf16>
    %381 = vector.shape_cast %380 : vector<2x1x2x128xbf16> to vector<2x2x128xbf16>
    %382 = arith.extf %381 : vector<2x2x128xbf16> to vector<2x2x128xf32>
    %c0_215 = arith.constant 0 : index
    %c18 = arith.constant 18 : index
    %c0_216 = arith.constant 0 : index
    %c0_217 = arith.constant 0 : index
    %383 = vector.load %arg2[%c0_215, %c18, %c0_216, %c0_217] : memref<2x34x2x128xbf16, #tpu.memory_space<vmem>>, vector<2x1x2x128xbf16>
    %384 = vector.shape_cast %383 : vector<2x1x2x128xbf16> to vector<2x2x128xbf16>
    %385 = arith.extf %384 : vector<2x2x128xbf16> to vector<2x2x128xf32>
    %386 = arith.maximumf %382, %385 : vector<2x2x128xf32>
    %c0_218 = arith.constant 0 : index
    %c19 = arith.constant 19 : index
    %c0_219 = arith.constant 0 : index
    %c0_220 = arith.constant 0 : index
    %387 = vector.load %arg2[%c0_218, %c19, %c0_219, %c0_220] : memref<2x34x2x128xbf16, #tpu.memory_space<vmem>>, vector<2x1x2x128xbf16>
    %388 = vector.shape_cast %387 : vector<2x1x2x128xbf16> to vector<2x2x128xbf16>
    %389 = arith.extf %388 : vector<2x2x128xbf16> to vector<2x2x128xf32>
    %390 = arith.maximumf %386, %389 : vector<2x2x128xf32>
    %c0_221 = arith.constant 0 : index
    %c20 = arith.constant 20 : index
    %c0_222 = arith.constant 0 : index
    %c0_223 = arith.constant 0 : index
    %391 = vector.load %arg2[%c0_221, %c20, %c0_222, %c0_223] : memref<2x34x2x128xbf16, #tpu.memory_space<vmem>>, vector<2x1x2x128xbf16>
    %392 = vector.shape_cast %391 : vector<2x1x2x128xbf16> to vector<2x2x128xbf16>
    %393 = arith.extf %392 : vector<2x2x128xbf16> to vector<2x2x128xf32>
    %394 = arith.maximumf %390, %393 : vector<2x2x128xf32>
    %c0_224 = arith.constant 0 : index
    %c21 = arith.constant 21 : index
    %c0_225 = arith.constant 0 : index
    %c0_226 = arith.constant 0 : index
    %395 = vector.load %arg2[%c0_224, %c21, %c0_225, %c0_226] : memref<2x34x2x128xbf16, #tpu.memory_space<vmem>>, vector<2x1x2x128xbf16>
    %396 = vector.shape_cast %395 : vector<2x1x2x128xbf16> to vector<2x2x128xbf16>
    %397 = arith.extf %396 : vector<2x2x128xbf16> to vector<2x2x128xf32>
    %398 = arith.maximumf %394, %397 : vector<2x2x128xf32>
    %c0_227 = arith.constant 0 : index
    %c22 = arith.constant 22 : index
    %c0_228 = arith.constant 0 : index
    %c0_229 = arith.constant 0 : index
    %399 = vector.load %arg2[%c0_227, %c22, %c0_228, %c0_229] : memref<2x34x2x128xbf16, #tpu.memory_space<vmem>>, vector<2x1x2x128xbf16>
    %400 = vector.shape_cast %399 : vector<2x1x2x128xbf16> to vector<2x2x128xbf16>
    %401 = arith.extf %400 : vector<2x2x128xbf16> to vector<2x2x128xf32>
    %402 = arith.maximumf %398, %401 : vector<2x2x128xf32>
    %c0_230 = arith.constant 0 : index
    %c23 = arith.constant 23 : index
    %c0_231 = arith.constant 0 : index
    %c0_232 = arith.constant 0 : index
    %403 = vector.load %arg2[%c0_230, %c23, %c0_231, %c0_232] : memref<2x34x2x128xbf16, #tpu.memory_space<vmem>>, vector<2x1x2x128xbf16>
    %404 = vector.shape_cast %403 : vector<2x1x2x128xbf16> to vector<2x2x128xbf16>
    %405 = arith.extf %404 : vector<2x2x128xbf16> to vector<2x2x128xf32>
    %406 = arith.maximumf %402, %405 : vector<2x2x128xf32>
    %c0_233 = arith.constant 0 : index
    %c24 = arith.constant 24 : index
    %c0_234 = arith.constant 0 : index
    %c0_235 = arith.constant 0 : index
    %407 = vector.load %arg2[%c0_233, %c24, %c0_234, %c0_235] : memref<2x34x2x128xbf16, #tpu.memory_space<vmem>>, vector<2x1x2x128xbf16>
    %408 = vector.shape_cast %407 : vector<2x1x2x128xbf16> to vector<2x2x128xbf16>
    %409 = arith.extf %408 : vector<2x2x128xbf16> to vector<2x2x128xf32>
    %410 = arith.maximumf %406, %409 : vector<2x2x128xf32>
    %c0_236 = arith.constant 0 : index
    %c25 = arith.constant 25 : index
    %c0_237 = arith.constant 0 : index
    %c0_238 = arith.constant 0 : index
    %411 = vector.load %arg2[%c0_236, %c25, %c0_237, %c0_238] : memref<2x34x2x128xbf16, #tpu.memory_space<vmem>>, vector<2x1x2x128xbf16>
    %412 = vector.shape_cast %411 : vector<2x1x2x128xbf16> to vector<2x2x128xbf16>
    %413 = arith.extf %412 : vector<2x2x128xbf16> to vector<2x2x128xf32>
    %414 = arith.maximumf %410, %413 : vector<2x2x128xf32>
    %c0_239 = arith.constant 0 : index
    %c26 = arith.constant 26 : index
    %c0_240 = arith.constant 0 : index
    %c0_241 = arith.constant 0 : index
    %415 = vector.load %arg2[%c0_239, %c26, %c0_240, %c0_241] : memref<2x34x2x128xbf16, #tpu.memory_space<vmem>>, vector<2x1x2x128xbf16>
    %416 = vector.shape_cast %415 : vector<2x1x2x128xbf16> to vector<2x2x128xbf16>
    %417 = arith.extf %416 : vector<2x2x128xbf16> to vector<2x2x128xf32>
    %418 = arith.maximumf %414, %417 : vector<2x2x128xf32>
    %c0_242 = arith.constant 0 : index
    %c27 = arith.constant 27 : index
    %c0_243 = arith.constant 0 : index
    %c0_244 = arith.constant 0 : index
    %419 = vector.load %arg2[%c0_242, %c27, %c0_243, %c0_244] : memref<2x34x2x128xbf16, #tpu.memory_space<vmem>>, vector<2x1x2x128xbf16>
    %420 = vector.shape_cast %419 : vector<2x1x2x128xbf16> to vector<2x2x128xbf16>
    %421 = arith.extf %420 : vector<2x2x128xbf16> to vector<2x2x128xf32>
    %422 = arith.maximumf %418, %421 : vector<2x2x128xf32>
    %c0_245 = arith.constant 0 : index
    %c28 = arith.constant 28 : index
    %c0_246 = arith.constant 0 : index
    %c0_247 = arith.constant 0 : index
    %423 = vector.load %arg2[%c0_245, %c28, %c0_246, %c0_247] : memref<2x34x2x128xbf16, #tpu.memory_space<vmem>>, vector<2x1x2x128xbf16>
    %424 = vector.shape_cast %423 : vector<2x1x2x128xbf16> to vector<2x2x128xbf16>
    %425 = arith.extf %424 : vector<2x2x128xbf16> to vector<2x2x128xf32>
    %426 = arith.maximumf %422, %425 : vector<2x2x128xf32>
    %c0_248 = arith.constant 0 : index
    %c29 = arith.constant 29 : index
    %c0_249 = arith.constant 0 : index
    %c0_250 = arith.constant 0 : index
    %427 = vector.load %arg2[%c0_248, %c29, %c0_249, %c0_250] : memref<2x34x2x128xbf16, #tpu.memory_space<vmem>>, vector<2x1x2x128xbf16>
    %428 = vector.shape_cast %427 : vector<2x1x2x128xbf16> to vector<2x2x128xbf16>
    %429 = arith.extf %428 : vector<2x2x128xbf16> to vector<2x2x128xf32>
    %430 = arith.maximumf %426, %429 : vector<2x2x128xf32>
    %c0_251 = arith.constant 0 : index
    %c30 = arith.constant 30 : index
    %c0_252 = arith.constant 0 : index
    %c0_253 = arith.constant 0 : index
    %431 = vector.load %arg2[%c0_251, %c30, %c0_252, %c0_253] : memref<2x34x2x128xbf16, #tpu.memory_space<vmem>>, vector<2x1x2x128xbf16>
    %432 = vector.shape_cast %431 : vector<2x1x2x128xbf16> to vector<2x2x128xbf16>
    %433 = arith.extf %432 : vector<2x2x128xbf16> to vector<2x2x128xf32>
    %434 = arith.maximumf %430, %433 : vector<2x2x128xf32>
    %c0_254 = arith.constant 0 : index
    %c31 = arith.constant 31 : index
    %c0_255 = arith.constant 0 : index
    %c0_256 = arith.constant 0 : index
    %435 = vector.load %arg2[%c0_254, %c31, %c0_255, %c0_256] : memref<2x34x2x128xbf16, #tpu.memory_space<vmem>>, vector<2x1x2x128xbf16>
    %436 = vector.shape_cast %435 : vector<2x1x2x128xbf16> to vector<2x2x128xbf16>
    %437 = arith.extf %436 : vector<2x2x128xbf16> to vector<2x2x128xf32>
    %438 = arith.maximumf %434, %437 : vector<2x2x128xf32>
    %c0_257 = arith.constant 0 : index
    %c32 = arith.constant 32 : index
    %c0_258 = arith.constant 0 : index
    %c0_259 = arith.constant 0 : index
    %439 = vector.load %arg2[%c0_257, %c32, %c0_258, %c0_259] : memref<2x34x2x128xbf16, #tpu.memory_space<vmem>>, vector<2x1x2x128xbf16>
    %440 = vector.shape_cast %439 : vector<2x1x2x128xbf16> to vector<2x2x128xbf16>
    %441 = arith.extf %440 : vector<2x2x128xbf16> to vector<2x2x128xf32>
    %442 = arith.maximumf %438, %441 : vector<2x2x128xf32>
    %c0_260 = arith.constant 0 : index
    %c33 = arith.constant 33 : index
    %c0_261 = arith.constant 0 : index
    %c0_262 = arith.constant 0 : index
    %443 = vector.load %arg2[%c0_260, %c33, %c0_261, %c0_262] : memref<2x34x2x128xbf16, #tpu.memory_space<vmem>>, vector<2x1x2x128xbf16>
    %444 = vector.shape_cast %443 : vector<2x1x2x128xbf16> to vector<2x2x128xbf16>
    %445 = arith.extf %444 : vector<2x2x128xbf16> to vector<2x2x128xf32>
    %446 = arith.maximumf %442, %445 : vector<2x2x128xf32>
    %cst_263 = arith.constant 0.000000e+00 : f32
    %447 = vector.broadcast %cst_263 : f32 to vector<2x2x128xf32>
    %cst_264 = arith.constant 0.000000e+00 : f32
    %448 = vector.broadcast %cst_264 : f32 to vector<2x2x128xf32>
    %c0_265 = arith.constant 0 : index
    %c17_266 = arith.constant 17 : index
    %c0_267 = arith.constant 0 : index
    %c0_268 = arith.constant 0 : index
    %449 = vector.load %arg2[%c0_265, %c17_266, %c0_267, %c0_268] : memref<2x34x2x128xbf16, #tpu.memory_space<vmem>>, vector<2x1x2x128xbf16>
    %450 = vector.shape_cast %449 : vector<2x1x2x128xbf16> to vector<2x2x128xbf16>
    %451 = arith.extf %450 : vector<2x2x128xbf16> to vector<2x2x128xf32>
    %452 = arith.subf %451, %446 : vector<2x2x128xf32>
    %453 = math.exp %452 : vector<2x2x128xf32>
    %454 = arith.addf %447, %453 : vector<2x2x128xf32>
    %cst_269 = arith.constant 0.000000e+00 : f32
    %455 = vector.broadcast %cst_269 : f32 to vector<2x2x128xf32>
    %456 = arith.subf %52, %455 : vector<2x2x128xf32>
    %457 = math.absf %456 : vector<2x2x128xf32>
    %cst_270 = arith.constant 1.000000e+00 : f32
    %458 = vector.broadcast %cst_270 : f32 to vector<2x2x128xf32>
    %459 = arith.subf %458, %457 : vector<2x2x128xf32>
    %cst_271 = arith.constant 0.000000e+00 : f32
    %460 = vector.broadcast %cst_271 : f32 to vector<2x2x128xf32>
    %461 = arith.maximumf %459, %460 : vector<2x2x128xf32>
    %462 = arith.mulf %451, %461 : vector<2x2x128xf32>
    %463 = arith.addf %448, %462 : vector<2x2x128xf32>
    %c0_272 = arith.constant 0 : index
    %c18_273 = arith.constant 18 : index
    %c0_274 = arith.constant 0 : index
    %c0_275 = arith.constant 0 : index
    %464 = vector.load %arg2[%c0_272, %c18_273, %c0_274, %c0_275] : memref<2x34x2x128xbf16, #tpu.memory_space<vmem>>, vector<2x1x2x128xbf16>
    %465 = vector.shape_cast %464 : vector<2x1x2x128xbf16> to vector<2x2x128xbf16>
    %466 = arith.extf %465 : vector<2x2x128xbf16> to vector<2x2x128xf32>
    %467 = arith.subf %466, %446 : vector<2x2x128xf32>
    %468 = math.exp %467 : vector<2x2x128xf32>
    %469 = arith.addf %454, %468 : vector<2x2x128xf32>
    %cst_276 = arith.constant 1.000000e+00 : f32
    %470 = vector.broadcast %cst_276 : f32 to vector<2x2x128xf32>
    %471 = arith.subf %52, %470 : vector<2x2x128xf32>
    %472 = math.absf %471 : vector<2x2x128xf32>
    %cst_277 = arith.constant 1.000000e+00 : f32
    %473 = vector.broadcast %cst_277 : f32 to vector<2x2x128xf32>
    %474 = arith.subf %473, %472 : vector<2x2x128xf32>
    %cst_278 = arith.constant 0.000000e+00 : f32
    %475 = vector.broadcast %cst_278 : f32 to vector<2x2x128xf32>
    %476 = arith.maximumf %474, %475 : vector<2x2x128xf32>
    %477 = arith.mulf %466, %476 : vector<2x2x128xf32>
    %478 = arith.addf %463, %477 : vector<2x2x128xf32>
    %c0_279 = arith.constant 0 : index
    %c19_280 = arith.constant 19 : index
    %c0_281 = arith.constant 0 : index
    %c0_282 = arith.constant 0 : index
    %479 = vector.load %arg2[%c0_279, %c19_280, %c0_281, %c0_282] : memref<2x34x2x128xbf16, #tpu.memory_space<vmem>>, vector<2x1x2x128xbf16>
    %480 = vector.shape_cast %479 : vector<2x1x2x128xbf16> to vector<2x2x128xbf16>
    %481 = arith.extf %480 : vector<2x2x128xbf16> to vector<2x2x128xf32>
    %482 = arith.subf %481, %446 : vector<2x2x128xf32>
    %483 = math.exp %482 : vector<2x2x128xf32>
    %484 = arith.addf %469, %483 : vector<2x2x128xf32>
    %cst_283 = arith.constant 2.000000e+00 : f32
    %485 = vector.broadcast %cst_283 : f32 to vector<2x2x128xf32>
    %486 = arith.subf %52, %485 : vector<2x2x128xf32>
    %487 = math.absf %486 : vector<2x2x128xf32>
    %cst_284 = arith.constant 1.000000e+00 : f32
    %488 = vector.broadcast %cst_284 : f32 to vector<2x2x128xf32>
    %489 = arith.subf %488, %487 : vector<2x2x128xf32>
    %cst_285 = arith.constant 0.000000e+00 : f32
    %490 = vector.broadcast %cst_285 : f32 to vector<2x2x128xf32>
    %491 = arith.maximumf %489, %490 : vector<2x2x128xf32>
    %492 = arith.mulf %481, %491 : vector<2x2x128xf32>
    %493 = arith.addf %478, %492 : vector<2x2x128xf32>
    %c0_286 = arith.constant 0 : index
    %c20_287 = arith.constant 20 : index
    %c0_288 = arith.constant 0 : index
    %c0_289 = arith.constant 0 : index
    %494 = vector.load %arg2[%c0_286, %c20_287, %c0_288, %c0_289] : memref<2x34x2x128xbf16, #tpu.memory_space<vmem>>, vector<2x1x2x128xbf16>
    %495 = vector.shape_cast %494 : vector<2x1x2x128xbf16> to vector<2x2x128xbf16>
    %496 = arith.extf %495 : vector<2x2x128xbf16> to vector<2x2x128xf32>
    %497 = arith.subf %496, %446 : vector<2x2x128xf32>
    %498 = math.exp %497 : vector<2x2x128xf32>
    %499 = arith.addf %484, %498 : vector<2x2x128xf32>
    %cst_290 = arith.constant 3.000000e+00 : f32
    %500 = vector.broadcast %cst_290 : f32 to vector<2x2x128xf32>
    %501 = arith.subf %52, %500 : vector<2x2x128xf32>
    %502 = math.absf %501 : vector<2x2x128xf32>
    %cst_291 = arith.constant 1.000000e+00 : f32
    %503 = vector.broadcast %cst_291 : f32 to vector<2x2x128xf32>
    %504 = arith.subf %503, %502 : vector<2x2x128xf32>
    %cst_292 = arith.constant 0.000000e+00 : f32
    %505 = vector.broadcast %cst_292 : f32 to vector<2x2x128xf32>
    %506 = arith.maximumf %504, %505 : vector<2x2x128xf32>
    %507 = arith.mulf %496, %506 : vector<2x2x128xf32>
    %508 = arith.addf %493, %507 : vector<2x2x128xf32>
    %c0_293 = arith.constant 0 : index
    %c21_294 = arith.constant 21 : index
    %c0_295 = arith.constant 0 : index
    %c0_296 = arith.constant 0 : index
    %509 = vector.load %arg2[%c0_293, %c21_294, %c0_295, %c0_296] : memref<2x34x2x128xbf16, #tpu.memory_space<vmem>>, vector<2x1x2x128xbf16>
    %510 = vector.shape_cast %509 : vector<2x1x2x128xbf16> to vector<2x2x128xbf16>
    %511 = arith.extf %510 : vector<2x2x128xbf16> to vector<2x2x128xf32>
    %512 = arith.subf %511, %446 : vector<2x2x128xf32>
    %513 = math.exp %512 : vector<2x2x128xf32>
    %514 = arith.addf %499, %513 : vector<2x2x128xf32>
    %cst_297 = arith.constant 4.000000e+00 : f32
    %515 = vector.broadcast %cst_297 : f32 to vector<2x2x128xf32>
    %516 = arith.subf %52, %515 : vector<2x2x128xf32>
    %517 = math.absf %516 : vector<2x2x128xf32>
    %cst_298 = arith.constant 1.000000e+00 : f32
    %518 = vector.broadcast %cst_298 : f32 to vector<2x2x128xf32>
    %519 = arith.subf %518, %517 : vector<2x2x128xf32>
    %cst_299 = arith.constant 0.000000e+00 : f32
    %520 = vector.broadcast %cst_299 : f32 to vector<2x2x128xf32>
    %521 = arith.maximumf %519, %520 : vector<2x2x128xf32>
    %522 = arith.mulf %511, %521 : vector<2x2x128xf32>
    %523 = arith.addf %508, %522 : vector<2x2x128xf32>
    %c0_300 = arith.constant 0 : index
    %c22_301 = arith.constant 22 : index
    %c0_302 = arith.constant 0 : index
    %c0_303 = arith.constant 0 : index
    %524 = vector.load %arg2[%c0_300, %c22_301, %c0_302, %c0_303] : memref<2x34x2x128xbf16, #tpu.memory_space<vmem>>, vector<2x1x2x128xbf16>
    %525 = vector.shape_cast %524 : vector<2x1x2x128xbf16> to vector<2x2x128xbf16>
    %526 = arith.extf %525 : vector<2x2x128xbf16> to vector<2x2x128xf32>
    %527 = arith.subf %526, %446 : vector<2x2x128xf32>
    %528 = math.exp %527 : vector<2x2x128xf32>
    %529 = arith.addf %514, %528 : vector<2x2x128xf32>
    %cst_304 = arith.constant 5.000000e+00 : f32
    %530 = vector.broadcast %cst_304 : f32 to vector<2x2x128xf32>
    %531 = arith.subf %52, %530 : vector<2x2x128xf32>
    %532 = math.absf %531 : vector<2x2x128xf32>
    %cst_305 = arith.constant 1.000000e+00 : f32
    %533 = vector.broadcast %cst_305 : f32 to vector<2x2x128xf32>
    %534 = arith.subf %533, %532 : vector<2x2x128xf32>
    %cst_306 = arith.constant 0.000000e+00 : f32
    %535 = vector.broadcast %cst_306 : f32 to vector<2x2x128xf32>
    %536 = arith.maximumf %534, %535 : vector<2x2x128xf32>
    %537 = arith.mulf %526, %536 : vector<2x2x128xf32>
    %538 = arith.addf %523, %537 : vector<2x2x128xf32>
    %c0_307 = arith.constant 0 : index
    %c23_308 = arith.constant 23 : index
    %c0_309 = arith.constant 0 : index
    %c0_310 = arith.constant 0 : index
    %539 = vector.load %arg2[%c0_307, %c23_308, %c0_309, %c0_310] : memref<2x34x2x128xbf16, #tpu.memory_space<vmem>>, vector<2x1x2x128xbf16>
    %540 = vector.shape_cast %539 : vector<2x1x2x128xbf16> to vector<2x2x128xbf16>
    %541 = arith.extf %540 : vector<2x2x128xbf16> to vector<2x2x128xf32>
    %542 = arith.subf %541, %446 : vector<2x2x128xf32>
    %543 = math.exp %542 : vector<2x2x128xf32>
    %544 = arith.addf %529, %543 : vector<2x2x128xf32>
    %cst_311 = arith.constant 6.000000e+00 : f32
    %545 = vector.broadcast %cst_311 : f32 to vector<2x2x128xf32>
    %546 = arith.subf %52, %545 : vector<2x2x128xf32>
    %547 = math.absf %546 : vector<2x2x128xf32>
    %cst_312 = arith.constant 1.000000e+00 : f32
    %548 = vector.broadcast %cst_312 : f32 to vector<2x2x128xf32>
    %549 = arith.subf %548, %547 : vector<2x2x128xf32>
    %cst_313 = arith.constant 0.000000e+00 : f32
    %550 = vector.broadcast %cst_313 : f32 to vector<2x2x128xf32>
    %551 = arith.maximumf %549, %550 : vector<2x2x128xf32>
    %552 = arith.mulf %541, %551 : vector<2x2x128xf32>
    %553 = arith.addf %538, %552 : vector<2x2x128xf32>
    %c0_314 = arith.constant 0 : index
    %c24_315 = arith.constant 24 : index
    %c0_316 = arith.constant 0 : index
    %c0_317 = arith.constant 0 : index
    %554 = vector.load %arg2[%c0_314, %c24_315, %c0_316, %c0_317] : memref<2x34x2x128xbf16, #tpu.memory_space<vmem>>, vector<2x1x2x128xbf16>
    %555 = vector.shape_cast %554 : vector<2x1x2x128xbf16> to vector<2x2x128xbf16>
    %556 = arith.extf %555 : vector<2x2x128xbf16> to vector<2x2x128xf32>
    %557 = arith.subf %556, %446 : vector<2x2x128xf32>
    %558 = math.exp %557 : vector<2x2x128xf32>
    %559 = arith.addf %544, %558 : vector<2x2x128xf32>
    %cst_318 = arith.constant 7.000000e+00 : f32
    %560 = vector.broadcast %cst_318 : f32 to vector<2x2x128xf32>
    %561 = arith.subf %52, %560 : vector<2x2x128xf32>
    %562 = math.absf %561 : vector<2x2x128xf32>
    %cst_319 = arith.constant 1.000000e+00 : f32
    %563 = vector.broadcast %cst_319 : f32 to vector<2x2x128xf32>
    %564 = arith.subf %563, %562 : vector<2x2x128xf32>
    %cst_320 = arith.constant 0.000000e+00 : f32
    %565 = vector.broadcast %cst_320 : f32 to vector<2x2x128xf32>
    %566 = arith.maximumf %564, %565 : vector<2x2x128xf32>
    %567 = arith.mulf %556, %566 : vector<2x2x128xf32>
    %568 = arith.addf %553, %567 : vector<2x2x128xf32>
    %c0_321 = arith.constant 0 : index
    %c25_322 = arith.constant 25 : index
    %c0_323 = arith.constant 0 : index
    %c0_324 = arith.constant 0 : index
    %569 = vector.load %arg2[%c0_321, %c25_322, %c0_323, %c0_324] : memref<2x34x2x128xbf16, #tpu.memory_space<vmem>>, vector<2x1x2x128xbf16>
    %570 = vector.shape_cast %569 : vector<2x1x2x128xbf16> to vector<2x2x128xbf16>
    %571 = arith.extf %570 : vector<2x2x128xbf16> to vector<2x2x128xf32>
    %572 = arith.subf %571, %446 : vector<2x2x128xf32>
    %573 = math.exp %572 : vector<2x2x128xf32>
    %574 = arith.addf %559, %573 : vector<2x2x128xf32>
    %cst_325 = arith.constant 8.000000e+00 : f32
    %575 = vector.broadcast %cst_325 : f32 to vector<2x2x128xf32>
    %576 = arith.subf %52, %575 : vector<2x2x128xf32>
    %577 = math.absf %576 : vector<2x2x128xf32>
    %cst_326 = arith.constant 1.000000e+00 : f32
    %578 = vector.broadcast %cst_326 : f32 to vector<2x2x128xf32>
    %579 = arith.subf %578, %577 : vector<2x2x128xf32>
    %cst_327 = arith.constant 0.000000e+00 : f32
    %580 = vector.broadcast %cst_327 : f32 to vector<2x2x128xf32>
    %581 = arith.maximumf %579, %580 : vector<2x2x128xf32>
    %582 = arith.mulf %571, %581 : vector<2x2x128xf32>
    %583 = arith.addf %568, %582 : vector<2x2x128xf32>
    %c0_328 = arith.constant 0 : index
    %c26_329 = arith.constant 26 : index
    %c0_330 = arith.constant 0 : index
    %c0_331 = arith.constant 0 : index
    %584 = vector.load %arg2[%c0_328, %c26_329, %c0_330, %c0_331] : memref<2x34x2x128xbf16, #tpu.memory_space<vmem>>, vector<2x1x2x128xbf16>
    %585 = vector.shape_cast %584 : vector<2x1x2x128xbf16> to vector<2x2x128xbf16>
    %586 = arith.extf %585 : vector<2x2x128xbf16> to vector<2x2x128xf32>
    %587 = arith.subf %586, %446 : vector<2x2x128xf32>
    %588 = math.exp %587 : vector<2x2x128xf32>
    %589 = arith.addf %574, %588 : vector<2x2x128xf32>
    %cst_332 = arith.constant 9.000000e+00 : f32
    %590 = vector.broadcast %cst_332 : f32 to vector<2x2x128xf32>
    %591 = arith.subf %52, %590 : vector<2x2x128xf32>
    %592 = math.absf %591 : vector<2x2x128xf32>
    %cst_333 = arith.constant 1.000000e+00 : f32
    %593 = vector.broadcast %cst_333 : f32 to vector<2x2x128xf32>
    %594 = arith.subf %593, %592 : vector<2x2x128xf32>
    %cst_334 = arith.constant 0.000000e+00 : f32
    %595 = vector.broadcast %cst_334 : f32 to vector<2x2x128xf32>
    %596 = arith.maximumf %594, %595 : vector<2x2x128xf32>
    %597 = arith.mulf %586, %596 : vector<2x2x128xf32>
    %598 = arith.addf %583, %597 : vector<2x2x128xf32>
    %c0_335 = arith.constant 0 : index
    %c27_336 = arith.constant 27 : index
    %c0_337 = arith.constant 0 : index
    %c0_338 = arith.constant 0 : index
    %599 = vector.load %arg2[%c0_335, %c27_336, %c0_337, %c0_338] : memref<2x34x2x128xbf16, #tpu.memory_space<vmem>>, vector<2x1x2x128xbf16>
    %600 = vector.shape_cast %599 : vector<2x1x2x128xbf16> to vector<2x2x128xbf16>
    %601 = arith.extf %600 : vector<2x2x128xbf16> to vector<2x2x128xf32>
    %602 = arith.subf %601, %446 : vector<2x2x128xf32>
    %603 = math.exp %602 : vector<2x2x128xf32>
    %604 = arith.addf %589, %603 : vector<2x2x128xf32>
    %cst_339 = arith.constant 1.000000e+01 : f32
    %605 = vector.broadcast %cst_339 : f32 to vector<2x2x128xf32>
    %606 = arith.subf %52, %605 : vector<2x2x128xf32>
    %607 = math.absf %606 : vector<2x2x128xf32>
    %cst_340 = arith.constant 1.000000e+00 : f32
    %608 = vector.broadcast %cst_340 : f32 to vector<2x2x128xf32>
    %609 = arith.subf %608, %607 : vector<2x2x128xf32>
    %cst_341 = arith.constant 0.000000e+00 : f32
    %610 = vector.broadcast %cst_341 : f32 to vector<2x2x128xf32>
    %611 = arith.maximumf %609, %610 : vector<2x2x128xf32>
    %612 = arith.mulf %601, %611 : vector<2x2x128xf32>
    %613 = arith.addf %598, %612 : vector<2x2x128xf32>
    %c0_342 = arith.constant 0 : index
    %c28_343 = arith.constant 28 : index
    %c0_344 = arith.constant 0 : index
    %c0_345 = arith.constant 0 : index
    %614 = vector.load %arg2[%c0_342, %c28_343, %c0_344, %c0_345] : memref<2x34x2x128xbf16, #tpu.memory_space<vmem>>, vector<2x1x2x128xbf16>
    %615 = vector.shape_cast %614 : vector<2x1x2x128xbf16> to vector<2x2x128xbf16>
    %616 = arith.extf %615 : vector<2x2x128xbf16> to vector<2x2x128xf32>
    %617 = arith.subf %616, %446 : vector<2x2x128xf32>
    %618 = math.exp %617 : vector<2x2x128xf32>
    %619 = arith.addf %604, %618 : vector<2x2x128xf32>
    %cst_346 = arith.constant 1.100000e+01 : f32
    %620 = vector.broadcast %cst_346 : f32 to vector<2x2x128xf32>
    %621 = arith.subf %52, %620 : vector<2x2x128xf32>
    %622 = math.absf %621 : vector<2x2x128xf32>
    %cst_347 = arith.constant 1.000000e+00 : f32
    %623 = vector.broadcast %cst_347 : f32 to vector<2x2x128xf32>
    %624 = arith.subf %623, %622 : vector<2x2x128xf32>
    %cst_348 = arith.constant 0.000000e+00 : f32
    %625 = vector.broadcast %cst_348 : f32 to vector<2x2x128xf32>
    %626 = arith.maximumf %624, %625 : vector<2x2x128xf32>
    %627 = arith.mulf %616, %626 : vector<2x2x128xf32>
    %628 = arith.addf %613, %627 : vector<2x2x128xf32>
    %c0_349 = arith.constant 0 : index
    %c29_350 = arith.constant 29 : index
    %c0_351 = arith.constant 0 : index
    %c0_352 = arith.constant 0 : index
    %629 = vector.load %arg2[%c0_349, %c29_350, %c0_351, %c0_352] : memref<2x34x2x128xbf16, #tpu.memory_space<vmem>>, vector<2x1x2x128xbf16>
    %630 = vector.shape_cast %629 : vector<2x1x2x128xbf16> to vector<2x2x128xbf16>
    %631 = arith.extf %630 : vector<2x2x128xbf16> to vector<2x2x128xf32>
    %632 = arith.subf %631, %446 : vector<2x2x128xf32>
    %633 = math.exp %632 : vector<2x2x128xf32>
    %634 = arith.addf %619, %633 : vector<2x2x128xf32>
    %cst_353 = arith.constant 1.200000e+01 : f32
    %635 = vector.broadcast %cst_353 : f32 to vector<2x2x128xf32>
    %636 = arith.subf %52, %635 : vector<2x2x128xf32>
    %637 = math.absf %636 : vector<2x2x128xf32>
    %cst_354 = arith.constant 1.000000e+00 : f32
    %638 = vector.broadcast %cst_354 : f32 to vector<2x2x128xf32>
    %639 = arith.subf %638, %637 : vector<2x2x128xf32>
    %cst_355 = arith.constant 0.000000e+00 : f32
    %640 = vector.broadcast %cst_355 : f32 to vector<2x2x128xf32>
    %641 = arith.maximumf %639, %640 : vector<2x2x128xf32>
    %642 = arith.mulf %631, %641 : vector<2x2x128xf32>
    %643 = arith.addf %628, %642 : vector<2x2x128xf32>
    %c0_356 = arith.constant 0 : index
    %c30_357 = arith.constant 30 : index
    %c0_358 = arith.constant 0 : index
    %c0_359 = arith.constant 0 : index
    %644 = vector.load %arg2[%c0_356, %c30_357, %c0_358, %c0_359] : memref<2x34x2x128xbf16, #tpu.memory_space<vmem>>, vector<2x1x2x128xbf16>
    %645 = vector.shape_cast %644 : vector<2x1x2x128xbf16> to vector<2x2x128xbf16>
    %646 = arith.extf %645 : vector<2x2x128xbf16> to vector<2x2x128xf32>
    %647 = arith.subf %646, %446 : vector<2x2x128xf32>
    %648 = math.exp %647 : vector<2x2x128xf32>
    %649 = arith.addf %634, %648 : vector<2x2x128xf32>
    %cst_360 = arith.constant 1.300000e+01 : f32
    %650 = vector.broadcast %cst_360 : f32 to vector<2x2x128xf32>
    %651 = arith.subf %52, %650 : vector<2x2x128xf32>
    %652 = math.absf %651 : vector<2x2x128xf32>
    %cst_361 = arith.constant 1.000000e+00 : f32
    %653 = vector.broadcast %cst_361 : f32 to vector<2x2x128xf32>
    %654 = arith.subf %653, %652 : vector<2x2x128xf32>
    %cst_362 = arith.constant 0.000000e+00 : f32
    %655 = vector.broadcast %cst_362 : f32 to vector<2x2x128xf32>
    %656 = arith.maximumf %654, %655 : vector<2x2x128xf32>
    %657 = arith.mulf %646, %656 : vector<2x2x128xf32>
    %658 = arith.addf %643, %657 : vector<2x2x128xf32>
    %c0_363 = arith.constant 0 : index
    %c31_364 = arith.constant 31 : index
    %c0_365 = arith.constant 0 : index
    %c0_366 = arith.constant 0 : index
    %659 = vector.load %arg2[%c0_363, %c31_364, %c0_365, %c0_366] : memref<2x34x2x128xbf16, #tpu.memory_space<vmem>>, vector<2x1x2x128xbf16>
    %660 = vector.shape_cast %659 : vector<2x1x2x128xbf16> to vector<2x2x128xbf16>
    %661 = arith.extf %660 : vector<2x2x128xbf16> to vector<2x2x128xf32>
    %662 = arith.subf %661, %446 : vector<2x2x128xf32>
    %663 = math.exp %662 : vector<2x2x128xf32>
    %664 = arith.addf %649, %663 : vector<2x2x128xf32>
    %cst_367 = arith.constant 1.400000e+01 : f32
    %665 = vector.broadcast %cst_367 : f32 to vector<2x2x128xf32>
    %666 = arith.subf %52, %665 : vector<2x2x128xf32>
    %667 = math.absf %666 : vector<2x2x128xf32>
    %cst_368 = arith.constant 1.000000e+00 : f32
    %668 = vector.broadcast %cst_368 : f32 to vector<2x2x128xf32>
    %669 = arith.subf %668, %667 : vector<2x2x128xf32>
    %cst_369 = arith.constant 0.000000e+00 : f32
    %670 = vector.broadcast %cst_369 : f32 to vector<2x2x128xf32>
    %671 = arith.maximumf %669, %670 : vector<2x2x128xf32>
    %672 = arith.mulf %661, %671 : vector<2x2x128xf32>
    %673 = arith.addf %658, %672 : vector<2x2x128xf32>
    %c0_370 = arith.constant 0 : index
    %c32_371 = arith.constant 32 : index
    %c0_372 = arith.constant 0 : index
    %c0_373 = arith.constant 0 : index
    %674 = vector.load %arg2[%c0_370, %c32_371, %c0_372, %c0_373] : memref<2x34x2x128xbf16, #tpu.memory_space<vmem>>, vector<2x1x2x128xbf16>
    %675 = vector.shape_cast %674 : vector<2x1x2x128xbf16> to vector<2x2x128xbf16>
    %676 = arith.extf %675 : vector<2x2x128xbf16> to vector<2x2x128xf32>
    %677 = arith.subf %676, %446 : vector<2x2x128xf32>
    %678 = math.exp %677 : vector<2x2x128xf32>
    %679 = arith.addf %664, %678 : vector<2x2x128xf32>
    %cst_374 = arith.constant 1.500000e+01 : f32
    %680 = vector.broadcast %cst_374 : f32 to vector<2x2x128xf32>
    %681 = arith.subf %52, %680 : vector<2x2x128xf32>
    %682 = math.absf %681 : vector<2x2x128xf32>
    %cst_375 = arith.constant 1.000000e+00 : f32
    %683 = vector.broadcast %cst_375 : f32 to vector<2x2x128xf32>
    %684 = arith.subf %683, %682 : vector<2x2x128xf32>
    %cst_376 = arith.constant 0.000000e+00 : f32
    %685 = vector.broadcast %cst_376 : f32 to vector<2x2x128xf32>
    %686 = arith.maximumf %684, %685 : vector<2x2x128xf32>
    %687 = arith.mulf %676, %686 : vector<2x2x128xf32>
    %688 = arith.addf %673, %687 : vector<2x2x128xf32>
    %c0_377 = arith.constant 0 : index
    %c33_378 = arith.constant 33 : index
    %c0_379 = arith.constant 0 : index
    %c0_380 = arith.constant 0 : index
    %689 = vector.load %arg2[%c0_377, %c33_378, %c0_379, %c0_380] : memref<2x34x2x128xbf16, #tpu.memory_space<vmem>>, vector<2x1x2x128xbf16>
    %690 = vector.shape_cast %689 : vector<2x1x2x128xbf16> to vector<2x2x128xbf16>
    %691 = arith.extf %690 : vector<2x2x128xbf16> to vector<2x2x128xf32>
    %692 = arith.subf %691, %446 : vector<2x2x128xf32>
    %693 = math.exp %692 : vector<2x2x128xf32>
    %694 = arith.addf %679, %693 : vector<2x2x128xf32>
    %cst_381 = arith.constant 1.600000e+01 : f32
    %695 = vector.broadcast %cst_381 : f32 to vector<2x2x128xf32>
    %696 = arith.subf %52, %695 : vector<2x2x128xf32>
    %697 = math.absf %696 : vector<2x2x128xf32>
    %cst_382 = arith.constant 1.000000e+00 : f32
    %698 = vector.broadcast %cst_382 : f32 to vector<2x2x128xf32>
    %699 = arith.subf %698, %697 : vector<2x2x128xf32>
    %cst_383 = arith.constant 0.000000e+00 : f32
    %700 = vector.broadcast %cst_383 : f32 to vector<2x2x128xf32>
    %701 = arith.maximumf %699, %700 : vector<2x2x128xf32>
    %702 = arith.mulf %691, %701 : vector<2x2x128xf32>
    %703 = arith.addf %688, %702 : vector<2x2x128xf32>
    %704 = math.log %694 : vector<2x2x128xf32>
    %705 = arith.addf %446, %704 : vector<2x2x128xf32>
    %706 = arith.subf %705, %703 : vector<2x2x128xf32>
    %707 = arith.addf %379, %706 : vector<2x2x128xf32>
    %cst_384 = arith.constant 5.000000e-01 : f32
    %708 = vector.broadcast %cst_384 : f32 to vector<2x2x128xf32>
    %709 = arith.mulf %708, %707 : vector<2x2x128xf32>
    %710 = arith.mulf %709, %6 : vector<2x2x128xf32>
    %711 = arith.addf %0, %8 : vector<2x2x128xf32>
    %712 = arith.addf %1, %24 : vector<2x2x128xf32>
    %713 = arith.addf %2, %42 : vector<2x2x128xf32>
    %714 = arith.addf %3, %6 : vector<2x2x128xf32>
    %715 = arith.addf %4, %710 : vector<2x2x128xf32>
    %c0_385 = arith.constant 0 : index
    %c0_386 = arith.constant 0 : index
    %c0_387 = arith.constant 0 : index
    %c0_388 = arith.constant 0 : index
    %716 = vector.load %arg3[%c0_385, %c0_386, %c0_387, %c0_388] : memref<1x10x2x128xf32, #tpu.memory_space<vmem>>, vector<1x2x2x128xf32>
    %717 = vector.shape_cast %716 : vector<1x2x2x128xf32> to vector<2x2x128xf32>
    %718 = vector.shape_cast %711 : vector<2x2x128xf32> to vector<1x2x2x128xf32>
    tpu.vector_store %arg3[%c0_385, %c0_386, %c0_387, %c0_388], %718 {strides = array<i32>} : memref<1x10x2x128xf32, #tpu.memory_space<vmem>>, vector<1x2x2x128xf32>,
    %c0_389 = arith.constant 0 : index
    %c2_390 = arith.constant 2 : index
    %c0_391 = arith.constant 0 : index
    %c0_392 = arith.constant 0 : index
    %719 = vector.load %arg3[%c0_389, %c2_390, %c0_391, %c0_392] : memref<1x10x2x128xf32, #tpu.memory_space<vmem>>, vector<1x2x2x128xf32>
    %720 = vector.shape_cast %719 : vector<1x2x2x128xf32> to vector<2x2x128xf32>
    %721 = vector.shape_cast %712 : vector<2x2x128xf32> to vector<1x2x2x128xf32>
    tpu.vector_store %arg3[%c0_389, %c2_390, %c0_391, %c0_392], %721 {strides = array<i32>} : memref<1x10x2x128xf32, #tpu.memory_space<vmem>>, vector<1x2x2x128xf32>,
    %c0_393 = arith.constant 0 : index
    %c4_394 = arith.constant 4 : index
    %c0_395 = arith.constant 0 : index
    %c0_396 = arith.constant 0 : index
    %722 = vector.load %arg3[%c0_393, %c4_394, %c0_395, %c0_396] : memref<1x10x2x128xf32, #tpu.memory_space<vmem>>, vector<1x2x2x128xf32>
    %723 = vector.shape_cast %722 : vector<1x2x2x128xf32> to vector<2x2x128xf32>
    %724 = vector.shape_cast %713 : vector<2x2x128xf32> to vector<1x2x2x128xf32>
    tpu.vector_store %arg3[%c0_393, %c4_394, %c0_395, %c0_396], %724 {strides = array<i32>} : memref<1x10x2x128xf32, #tpu.memory_space<vmem>>, vector<1x2x2x128xf32>,
    %c0_397 = arith.constant 0 : index
    %c6_398 = arith.constant 6 : index
    %c0_399 = arith.constant 0 : index
    %c0_400 = arith.constant 0 : index
    %725 = vector.load %arg3[%c0_397, %c6_398, %c0_399, %c0_400] : memref<1x10x2x128xf32, #tpu.memory_space<vmem>>, vector<1x2x2x128xf32>
    %726 = vector.shape_cast %725 : vector<1x2x2x128xf32> to vector<2x2x128xf32>
    %727 = vector.shape_cast %714 : vector<2x2x128xf32> to vector<1x2x2x128xf32>
    tpu.vector_store %arg3[%c0_397, %c6_398, %c0_399, %c0_400], %727 {strides = array<i32>} : memref<1x10x2x128xf32, #tpu.memory_space<vmem>>, vector<1x2x2x128xf32>,
    %c0_401 = arith.constant 0 : index
    %c8_402 = arith.constant 8 : index
    %c0_403 = arith.constant 0 : index
    %c0_404 = arith.constant 0 : index
    %728 = vector.load %arg3[%c0_401, %c8_402, %c0_403, %c0_404] : memref<1x10x2x128xf32, #tpu.memory_space<vmem>>, vector<1x2x2x128xf32>
    %729 = vector.shape_cast %728 : vector<1x2x2x128xf32> to vector<2x2x128xf32>
    %730 = vector.shape_cast %715 : vector<2x2x128xf32> to vector<1x2x2x128xf32>
    tpu.vector_store %arg3[%c0_401, %c8_402, %c0_403, %c0_404], %730 {strides = array<i32>} : memref<1x10x2x128xf32, #tpu.memory_space<vmem>>, vector<1x2x2x128xf32>,
    return
  }
  func.func @transform_0(%arg0: i32) -> (i32, i32, i32, i32) {
    %c0_i32 = arith.constant 0 : i32
    %c0_i32_0 = arith.constant 0 : i32
    %c0_i32_1 = arith.constant 0 : i32
    %c0_i32_2 = arith.constant 0 : i32
    return %c0_i32, %c0_i32_0, %arg0, %c0_i32_1 : i32, i32, i32, i32
  }
  func.func @transform_1(%arg0: i32) -> (i32, i32, i32, i32) {
    %c0_i32 = arith.constant 0 : i32
    %c0_i32_0 = arith.constant 0 : i32
    %c0_i32_1 = arith.constant 0 : i32
    %c0_i32_2 = arith.constant 0 : i32
    return %c0_i32, %c0_i32_0, %arg0, %c0_i32_1 : i32, i32, i32, i32
  }
  func.func @transform_2(%arg0: i32) -> (i32, i32, i32, i32) {
    %c0_i32 = arith.constant 0 : i32
    %c0_i32_0 = arith.constant 0 : i32
    %c0_i32_1 = arith.constant 0 : i32
    %c0_i32_2 = arith.constant 0 : i32
    return %arg0, %c0_i32, %c0_i32_0, %c0_i32_1 : i32, i32, i32, i32
  }
}

</mosaic_0001>

<llo_original>
// kernel: bbox_loss_pallas.1
$region0: #{bbox_loss_pallas.1}
  #allocation0 [shape = 'u32[]', space=smem, size = 0x4, offset = 0x4, fixed_abs, tag = 'smem constant byte address 0x4 - core index']
  #allocation1 [shape = 'u32[144,128]{1,0:T(1,128)}', space=vmem, size = 0x12000, scoped, tag = 'internal scratch']
  %s0 = inlined_call_operand.vmem [shape: f32[2,7,2,128], index: 0, kind: input, shape index: {}]
  %s1 = inlined_call_operand.vmem [shape: bf16[2,34,2,128], index: 1, kind: input, shape index: {}]
  %s2 = inlined_call_operand.vmem [shape: f32[1,10,2,128], index: 2, kind: output, shape index: {}]
  %s3 = sld [smem:[#allocation0]]
  $region18: #{bbox_loss_pallas.1} parent=0
    _
  %s5 = ssub.s32 1, %s3
  %s6 = scalar_select 0, %s5, %s3
  // Predicated region
  $region2: #{bbox_loss_pallas.1} parent=0 // pred_check
    _
  $region3: #{bbox_loss_pallas.1} parent=0 // pred_check_branch
    %8 = sbr.rel (0) target = $region5
  $region4: #{bbox_loss_pallas.1} parent=0 // pred_region
    _
  $region5: #{bbox_loss_pallas.1} parent=0 // pred_fallthru
    _
  // Predicated region
  $region6: #{bbox_loss_pallas.1} parent=0 // pred_check
    _
  $region7: #{bbox_loss_pallas.1} parent=0 // pred_check_branch
    %10 = sbr.rel (0) target = $region9
  $region8: #{bbox_loss_pallas.1} parent=0 // pred_region
    _
  $region9: #{bbox_loss_pallas.1} parent=0 // pred_fallthru
    _
  %v11 = vld [vmem:[%s0] sm:$0x3]
  %v12 = vld [vmem:[%s0 + $0xe] sm:$0x3]
  %s13 = scalar_lea.vmem %s0, 2
  %v14 = vld [vmem:[%s13] sm:$0x3]
  %v15 = vld [vmem:[%s13 + $0xe] sm:$0x3]
  %s16 = scalar_lea.vmem %s0, 4
  %v17 = vld [vmem:[%s16] sm:$0x3]
  %v18 = vld [vmem:[%s16 + $0xe] sm:$0x3]
  %s19 = scalar_lea.vmem %s0, 6
  %v20 = vld [vmem:[%s19] sm:$0x3]
  %v21 = vld [vmem:[%s19 + $0xe] sm:$0x3]
  %s22 = scalar_lea.vmem %s0, 8
  %v23 = vld [vmem:[%s22] sm:$0x3]
  %v24 = vld [vmem:[%s22 + $0xe] sm:$0x3]
  %s25 = scalar_lea.vmem %s0, 10
  %v26 = vld [vmem:[%s25] sm:$0x3]
  %v27 = vld [vmem:[%s25 + $0xe] sm:$0x3]
  %s28 = scalar_lea.vmem %s0, 12
  %v29 = vld [vmem:[%s28] sm:$0x3]
  %v30 = vld [vmem:[%s28 + $0xe] sm:$0x3]
  %v31 = vsub.f32 %v17, %v23
  %v32 = vsub.f32 %v18, %v24
  %v33 = vand.u32 2147483647, %v31
  %v34 = vand.u32 2147483647, %v32
  %v35 = vsub.f32 %v20, %v26
  %v36 = vsub.f32 %v21, %v27
  %v37 = vand.u32 2147483647, %v35
  %v38 = vand.u32 2147483647, %v36
  %v39 = vadd.f32 %v33, %v37
  %v40 = vadd.f32 %v34, %v38
  %v41 = vmul.f32 %v39, %v14
  %v42 = vmul.f32 %v40, %v15
  %v43 = vmin.f32 %v20, %v26
  %v44 = vmin.f32 %v21, %v27
  %v45 = vmax.f32 %v17, %v23
  %v46 = vmax.f32 %v18, %v24
  %v47 = vsub.f32 %v43, %v45
  %v48 = vsub.f32 %v44, %v46
  %v49 = vmax.f32 %v47, 0.0
  %v50 = vmax.f32 %v48, 0.0
  %v51 = vsub.f32 %v20, %v17
  %v52 = vsub.f32 %v21, %v18
  %v53 = vsub.f32 %v26, %v23
  %v54 = vsub.f32 %v27, %v24
  %v55 = vadd.f32 %v51, %v53
  %v56 = vadd.f32 %v52, %v54
  %v57 = vsub.f32 %v55, %v49
  %v58 = vsub.f32 %v56, %v50
  %vm59 = vcmp.gt.f32.partialorder %v14, 0.0
  %vm60 = vcmp.gt.f32.partialorder %v15, 0.0
  %v61 = vsel %vm59, %v57, 1.0
  %v62 = vsel %vm60, %v58, 1.0
  %v63 = vrcp.pop %v61
  %v64 = vrcp.pop %v62
  %v65 = vmul.f32 %v49, %v63
  %v66 = vmul.f32 %v50, %v64
  %v67 = vsub.f32 1.0, %v65
  %v68 = vsub.f32 1.0, %v66
  %v69 = vmul.f32 %v67, %v14
  %v70 = vmul.f32 %v68, %v15
  %v71 = vsub.f32 %v29, %v23
  %v72 = vsub.f32 %v30, %v24
  %v73 = vmax.f32 %v71, 0.0
  %v74 = vmax.f32 %v72, 0.0
  %v75 = vmin.f32 %v73, 15.99
  %v76 = vmin.f32 %v74, 15.99
  %v77 = vsub.f32 %v26, %v29
  %v78 = vsub.f32 %v27, %v30
  %v79 = vmax.f32 %v77, 0.0
  %v80 = vmax.f32 %v78, 0.0
  %v81 = vmin.f32 %v79, 15.99
  %v82 = vmin.f32 %v80, 15.99
  %v83 = vld [vmem:[%s1] sm:$0x1]
  %v84 = vld [vmem:[%s1 + $0x22] sm:$0x1]
  %v85 = vunpack.c.l.bf16 %v83
  %v86 = vunpack.c.l.bf16 %v84
  %s87 = scalar_lea.vmem %s1, 1
  %v88 = vld [vmem:[%s87] sm:$0x1]
  %v89 = vld [vmem:[%s87 + $0x22] sm:$0x1]
  %v90 = vunpack.c.l.bf16 %v88
  %v91 = vunpack.c.l.bf16 %v89
  %v92 = vmax.f32 %v85, %v90
  %v93 = vmax.f32 %v86, %v91
  %s94 = scalar_lea.vmem %s1, 2
  %v95 = vld [vmem:[%s94] sm:$0x1]
  %v96 = vld [vmem:[%s94 + $0x22] sm:$0x1]
  %v97 = vunpack.c.l.bf16 %v95
  %v98 = vunpack.c.l.bf16 %v96
  %v99 = vmax.f32 %v92, %v97
  %v100 = vmax.f32 %v93, %v98
  %s101 = scalar_lea.vmem %s1, 3
  %v102 = vld [vmem:[%s101] sm:$0x1]
  %v103 = vld [vmem:[%s101 + $0x22] sm:$0x1]
  %v104 = vunpack.c.l.bf16 %v102
  %v105 = vunpack.c.l.bf16 %v103
  %v106 = vmax.f32 %v99, %v104
  %v107 = vmax.f32 %v100, %v105
  %s108 = scalar_lea.vmem %s1, 4
  %v109 = vld [vmem:[%s108] sm:$0x1]
  %v110 = vld [vmem:[%s108 + $0x22] sm:$0x1]
  %v111 = vunpack.c.l.bf16 %v109
  %v112 = vunpack.c.l.bf16 %v110
  %v113 = vmax.f32 %v106, %v111
  %v114 = vmax.f32 %v107, %v112
  %s115 = scalar_lea.vmem %s1, 5
  %v116 = vld [vmem:[%s115] sm:$0x1]
  %v117 = vld [vmem:[%s115 + $0x22] sm:$0x1]
  %v118 = vunpack.c.l.bf16 %v116
  %v119 = vunpack.c.l.bf16 %v117
  %v120 = vmax.f32 %v113, %v118
  %v121 = vmax.f32 %v114, %v119
  %s122 = scalar_lea.vmem %s1, 6
  %v123 = vld [vmem:[%s122] sm:$0x1]
  %v124 = vld [vmem:[%s122 + $0x22] sm:$0x1]
  %v125 = vunpack.c.l.bf16 %v123
  %v126 = vunpack.c.l.bf16 %v124
  %v127 = vmax.f32 %v120, %v125
  %v128 = vmax.f32 %v121, %v126
  %s129 = scalar_lea.vmem %s1, 7
  %v130 = vld [vmem:[%s129] sm:$0x1]
  %v131 = vld [vmem:[%s129 + $0x22] sm:$0x1]
  %v132 = vunpack.c.l.bf16 %v130
  %v133 = vunpack.c.l.bf16 %v131
  %v134 = vmax.f32 %v127, %v132
  %v135 = vmax.f32 %v128, %v133
  %s136 = scalar_lea.vmem %s1, 8
  %v137 = vld [vmem:[%s136] sm:$0x1]
  %v138 = vld [vmem:[%s136 + $0x22] sm:$0x1]
  %v139 = vunpack.c.l.bf16 %v137
  %v140 = vunpack.c.l.bf16 %v138
  %v141 = vmax.f32 %v134, %v139
  %v142 = vmax.f32 %v135, %v140
  %s143 = scalar_lea.vmem %s1, 9
  %v144 = vld [vmem:[%s143] sm:$0x1]
  %v145 = vld [vmem:[%s143 + $0x22] sm:$0x1]
  %v146 = vunpack.c.l.bf16 %v144
  %v147 = vunpack.c.l.bf16 %v145
  %v148 = vmax.f32 %v141, %v146
  %v149 = vmax.f32 %v142, %v147
  %s150 = scalar_lea.vmem %s1, 10
  %v151 = vld [vmem:[%s150] sm:$0x1]
  %v152 = vld [vmem:[%s150 + $0x22] sm:$0x1]
  %v153 = vunpack.c.l.bf16 %v151
  %v154 = vunpack.c.l.bf16 %v152
  %v155 = vmax.f32 %v148, %v153
  %v156 = vmax.f32 %v149, %v154
  %s157 = scalar_lea.vmem %s1, 11
  %v158 = vld [vmem:[%s157] sm:$0x1]
  %v159 = vld [vmem:[%s157 + $0x22] sm:$0x1]
  %v160 = vunpack.c.l.bf16 %v158
  %v161 = vunpack.c.l.bf16 %v159
  %v162 = vmax.f32 %v155, %v160
  %v163 = vmax.f32 %v156, %v161
  %s164 = scalar_lea.vmem %s1, 12
  %v165 = vld [vmem:[%s164] sm:$0x1]
  %v166 = vld [vmem:[%s164 + $0x22] sm:$0x1]
  %v167 = vunpack.c.l.bf16 %v165
  %v168 = vunpack.c.l.bf16 %v166
  %v169 = vmax.f32 %v162, %v167
  %v170 = vmax.f32 %v163, %v168
  %s171 = scalar_lea.vmem %s1, 13
  %v172 = vld [vmem:[%s171] sm:$0x1]
  %v173 = vld [vmem:[%s171 + $0x22] sm:$0x1]
  %v174 = vunpack.c.l.bf16 %v172
  %v175 = vunpack.c.l.bf16 %v173
  %v176 = vmax.f32 %v169, %v174
  %v177 = vmax.f32 %v170, %v175
  %s178 = scalar_lea.vmem %s1, 14
  %v179 = vld [vmem:[%s178] sm:$0x1]
  %v180 = vld [vmem:[%s178 + $0x22] sm:$0x1]
  %v181 = vunpack.c.l.bf16 %v179
  %v182 = vunpack.c.l.bf16 %v180
  %v183 = vmax.f32 %v176, %v181
  %v184 = vmax.f32 %v177, %v182
  %s185 = scalar_lea.vmem %s1, 15
  %v186 = vld [vmem:[%s185] sm:$0x1]
  %v187 = vld [vmem:[%s185 + $0x22] sm:$0x1]
  %v188 = vunpack.c.l.bf16 %v186
  %v189 = vunpack.c.l.bf16 %v187
  %v190 = vmax.f32 %v183, %v188
  %v191 = vmax.f32 %v184, %v189
  %s192 = scalar_lea.vmem %s1, 16
  %v193 = vld [vmem:[%s192] sm:$0x1]
  %v194 = vld [vmem:[%s192 + $0x22] sm:$0x1]
  %v195 = vunpack.c.l.bf16 %v193
  %v196 = vunpack.c.l.bf16 %v194
  %v197 = vmax.f32 %v190, %v195
  %v198 = vmax.f32 %v191, %v196
  %v199 = vsub.f32 %v85, %v197
  %v200 = vsub.f32 %v86, %v198
  %v201 = vmul.f32 %v199, 1.442695
  %v202 = vpow.pop %v201
  %v203 = vmul.f32 %v200, 1.442695
  %v204 = vpow.pop %v203
  %v205 = vadd.f32 %v202, 0.0
  %v206 = vadd.f32 %v204, 0.0
  %v207 = vand.u32 2147483647, %v75
  %v208 = vand.u32 2147483647, %v76
  %v209 = vsub.f32 1.0, %v207
  %v210 = vsub.f32 1.0, %v208
  %v211 = vmax.f32 %v209, 0.0
  %v212 = vmax.f32 %v210, 0.0
  %v213 = vmul.f32 %v85, %v211
  %v214 = vmul.f32 %v86, %v212
  %v215 = vadd.f32 %v213, 0.0
  %v216 = vadd.f32 %v214, 0.0
  %v217 = vsub.f32 %v90, %v197
  %v218 = vsub.f32 %v91, %v198
  %v219 = vmul.f32 %v217, 1.442695
  %v220 = vpow.pop %v219
  %v221 = vmul.f32 %v218, 1.442695
  %v222 = vpow.pop %v221
  %v223 = vadd.f32 %v205, %v220
  %v224 = vadd.f32 %v206, %v222
  %v225 = vsub.f32 %v75, 1.0
  %v226 = vsub.f32 %v76, 1.0
  %v227 = vand.u32 2147483647, %v225
  %v228 = vand.u32 2147483647, %v226
  %v229 = vsub.f32 1.0, %v227
  %v230 = vsub.f32 1.0, %v228
  %v231 = vmax.f32 %v229, 0.0
  %v232 = vmax.f32 %v230, 0.0
  %v233 = vmul.f32 %v90, %v231
  %v234 = vmul.f32 %v91, %v232
  %v235 = vadd.f32 %v215, %v233
  %v236 = vadd.f32 %v216, %v234
  %v237 = vsub.f32 %v97, %v197
  %v238 = vsub.f32 %v98, %v198
  %v239 = vmul.f32 %v237, 1.442695
  %v240 = vpow.pop %v239
  %v241 = vmul.f32 %v238, 1.442695
  %v242 = vpow.pop %v241
  %v243 = vadd.f32 %v223, %v240
  %v244 = vadd.f32 %v224, %v242
  %v245 = vsub.f32 %v75, 2.0
  %v246 = vsub.f32 %v76, 2.0
  %v247 = vand.u32 2147483647, %v245
  %v248 = vand.u32 2147483647, %v246
  %v249 = vsub.f32 1.0, %v247
  %v250 = vsub.f32 1.0, %v248
  %v251 = vmax.f32 %v249, 0.0
  %v252 = vmax.f32 %v250, 0.0
  %v253 = vmul.f32 %v97, %v251
  %v254 = vmul.f32 %v98, %v252
  %v255 = vadd.f32 %v235, %v253
  %v256 = vadd.f32 %v236, %v254
  %v257 = vsub.f32 %v104, %v197
  %v258 = vsub.f32 %v105, %v198
  %v259 = vmul.f32 %v257, 1.442695
  %v260 = vpow.pop %v259
  %v261 = vmul.f32 %v258, 1.442695
  %v262 = vpow.pop %v261
  %v263 = vadd.f32 %v243, %v260
  %v264 = vadd.f32 %v244, %v262
  %v265 = vsub.f32 %v75, 3.0
  %v266 = vsub.f32 %v76, 3.0
  %v267 = vand.u32 2147483647, %v265
  %v268 = vand.u32 2147483647, %v266
  %v269 = vsub.f32 1.0, %v267
  %v270 = vsub.f32 1.0, %v268
  %v271 = vmax.f32 %v269, 0.0
  %v272 = vmax.f32 %v270, 0.0
  %v273 = vmul.f32 %v104, %v271
  %v274 = vmul.f32 %v105, %v272
  %v275 = vadd.f32 %v255, %v273
  %v276 = vadd.f32 %v256, %v274
  %v277 = vsub.f32 %v111, %v197
  %v278 = vsub.f32 %v112, %v198
  %v279 = vmul.f32 %v277, 1.442695
  %v280 = vpow.pop %v279
  %v281 = vmul.f32 %v278, 1.442695
  %v282 = vpow.pop %v281
  %v283 = vadd.f32 %v263, %v280
  %v284 = vadd.f32 %v264, %v282
  %v285 = vsub.f32 %v75, 4.0
  %v286 = vsub.f32 %v76, 4.0
  %v287 = vand.u32 2147483647, %v285
  %v288 = vand.u32 2147483647, %v286
  %v289 = vsub.f32 1.0, %v287
  %v290 = vsub.f32 1.0, %v288
  %v291 = vmax.f32 %v289, 0.0
  %v292 = vmax.f32 %v290, 0.0
  %v293 = vmul.f32 %v111, %v291
  %v294 = vmul.f32 %v112, %v292
  %v295 = vadd.f32 %v275, %v293
  %v296 = vadd.f32 %v276, %v294
  %v297 = vsub.f32 %v118, %v197
  %v298 = vsub.f32 %v119, %v198
  %v299 = vmul.f32 %v297, 1.442695
  %v300 = vpow.pop %v299
  %v301 = vmul.f32 %v298, 1.442695
  %v302 = vpow.pop %v301
  %v303 = vadd.f32 %v283, %v300
  %v304 = vadd.f32 %v284, %v302
  %v305 = vsub.f32 %v75, 5.0
  %v306 = vsub.f32 %v76, 5.0
  %v307 = vand.u32 2147483647, %v305
  %v308 = vand.u32 2147483647, %v306
  %v309 = vsub.f32 1.0, %v307
  %v310 = vsub.f32 1.0, %v308
  %v311 = vmax.f32 %v309, 0.0
  %v312 = vmax.f32 %v310, 0.0
  %v313 = vmul.f32 %v118, %v311
  %v314 = vmul.f32 %v119, %v312
  %v315 = vadd.f32 %v295, %v313
  %v316 = vadd.f32 %v296, %v314
  %v317 = vsub.f32 %v125, %v197
  %v318 = vsub.f32 %v126, %v198
  %v319 = vmul.f32 %v317, 1.442695
  %v320 = vpow.pop %v319
  %v321 = vmul.f32 %v318, 1.442695
  %v322 = vpow.pop %v321
  %v323 = vadd.f32 %v303, %v320
  %v324 = vadd.f32 %v304, %v322
  %v325 = vsub.f32 %v75, 6.0
  %v326 = vsub.f32 %v76, 6.0
  %v327 = vand.u32 2147483647, %v325
  %v328 = vand.u32 2147483647, %v326
  %v329 = vsub.f32 1.0, %v327
  %v330 = vsub.f32 1.0, %v328
  %v331 = vmax.f32 %v329, 0.0
  %v332 = vmax.f32 %v330, 0.0
  %v333 = vmul.f32 %v125, %v331
  %v334 = vmul.f32 %v126, %v332
  %v335 = vadd.f32 %v315, %v333
  %v336 = vadd.f32 %v316, %v334
  %v337 = vsub.f32 %v132, %v197
  %v338 = vsub.f32 %v133, %v198
  %v339 = vmul.f32 %v337, 1.442695
  %v340 = vpow.pop %v339
  %v341 = vmul.f32 %v338, 1.442695
  %v342 = vpow.pop %v341
  %v343 = vadd.f32 %v323, %v340
  %v344 = vadd.f32 %v324, %v342
  %v345 = vsub.f32 %v75, 7.0
  %v346 = vsub.f32 %v76, 7.0
  %v347 = vand.u32 2147483647, %v345
  %v348 = vand.u32 2147483647, %v346
  %v349 = vsub.f32 1.0, %v347
  %v350 = vsub.f32 1.0, %v348
  %v351 = vmax.f32 %v349, 0.0
  %v352 = vmax.f32 %v350, 0.0
  %v353 = vmul.f32 %v132, %v351
  %v354 = vmul.f32 %v133, %v352
  %v355 = vadd.f32 %v335, %v353
  %v356 = vadd.f32 %v336, %v354
  %v357 = vsub.f32 %v139, %v197
  %v358 = vsub.f32 %v140, %v198
  %v359 = vmul.f32 %v357, 1.442695
  %v360 = vpow.pop %v359
  %v361 = vmul.f32 %v358, 1.442695
  %v362 = vpow.pop %v361
  %v363 = vadd.f32 %v343, %v360
  %v364 = vadd.f32 %v344, %v362
  %v365 = vsub.f32 %v75, 8.0
  %v366 = vsub.f32 %v76, 8.0
  %v367 = vand.u32 2147483647, %v365
  %v368 = vand.u32 2147483647, %v366
  %v369 = vsub.f32 1.0, %v367
  %v370 = vsub.f32 1.0, %v368
  %v371 = vmax.f32 %v369, 0.0
  %v372 = vmax.f32 %v370, 0.0
  %v373 = vmul.f32 %v139, %v371
  %v374 = vmul.f32 %v140, %v372
  %v375 = vadd.f32 %v355, %v373
  %v376 = vadd.f32 %v356, %v374
  %v377 = vsub.f32 %v146, %v197
  %v378 = vsub.f32 %v147, %v198
  %v379 = vmul.f32 %v377, 1.442695
  %v380 = vpow.pop %v379
  %v381 = vmul.f32 %v378, 1.442695
  %v382 = vpow.pop %v381
  %v383 = vadd.f32 %v363, %v380
  %v384 = vadd.f32 %v364, %v382
  %v385 = vsub.f32 %v75, 9.0
  %v386 = vsub.f32 %v76, 9.0
  %v387 = vand.u32 2147483647, %v385
  %v388 = vand.u32 2147483647, %v386
  %v389 = vsub.f32 1.0, %v387
  %v390 = vsub.f32 1.0, %v388
  %v391 = vmax.f32 %v389, 0.0
  %v392 = vmax.f32 %v390, 0.0
  %v393 = vmul.f32 %v146, %v391
  %v394 = vmul.f32 %v147, %v392
  %v395 = vadd.f32 %v375, %v393
  %v396 = vadd.f32 %v376, %v394
  %v397 = vsub.f32 %v153, %v197
  %v398 = vsub.f32 %v154, %v198
  %v399 = vmul.f32 %v397, 1.442695
  %v400 = vpow.pop %v399
  %v401 = vmul.f32 %v398, 1.442695
  %v402 = vpow.pop %v401
  %v403 = vadd.f32 %v383, %v400
  %v404 = vadd.f32 %v384, %v402
  %v405 = vsub.f32 %v75, 10.0
  %v406 = vsub.f32 %v76, 10.0
  %v407 = vand.u32 2147483647, %v405
  %v408 = vand.u32 2147483647, %v406
  %v409 = vsub.f32 1.0, %v407
  %v410 = vsub.f32 1.0, %v408
  %v411 = vmax.f32 %v409, 0.0
  %v412 = vmax.f32 %v410, 0.0
  %v413 = vmul.f32 %v153, %v411
  %v414 = vmul.f32 %v154, %v412
  %v415 = vadd.f32 %v395, %v413
  %v416 = vadd.f32 %v396, %v414
  %v417 = vsub.f32 %v160, %v197
  %v418 = vsub.f32 %v161, %v198
  %v419 = vmul.f32 %v417, 1.442695
  %v420 = vpow.pop %v419
  %v421 = vmul.f32 %v418, 1.442695
  %v422 = vpow.pop %v421
  %v423 = vadd.f32 %v403, %v420
  %v424 = vadd.f32 %v404, %v422
  %v425 = vsub.f32 %v75, 11.0
  %v426 = vsub.f32 %v76, 11.0
  %v427 = vand.u32 2147483647, %v425
  %v428 = vand.u32 2147483647, %v426
  %v429 = vsub.f32 1.0, %v427
  %v430 = vsub.f32 1.0, %v428
  %v431 = vmax.f32 %v429, 0.0
  %v432 = vmax.f32 %v430, 0.0
  %v433 = vmul.f32 %v160, %v431
  %v434 = vmul.f32 %v161, %v432
  %v435 = vadd.f32 %v415, %v433
  %v436 = vadd.f32 %v416, %v434
  %v437 = vsub.f32 %v167, %v197
  %v438 = vsub.f32 %v168, %v198
  %v439 = vmul.f32 %v437, 1.442695
  %v440 = vpow.pop %v439
  %v441 = vmul.f32 %v438, 1.442695
  %v442 = vpow.pop %v441
  %v443 = vadd.f32 %v423, %v440
  %v444 = vadd.f32 %v424, %v442
  %v445 = vsub.f32 %v75, 12.0
  %v446 = vsub.f32 %v76, 12.0
  %v447 = vand.u32 2147483647, %v445
  %v448 = vand.u32 2147483647, %v446
  %v449 = vsub.f32 1.0, %v447
  %v450 = vsub.f32 1.0, %v448
  %v451 = vmax.f32 %v449, 0.0
  %v452 = vmax.f32 %v450, 0.0
  %v453 = vmul.f32 %v167, %v451
  %v454 = vmul.f32 %v168, %v452
  %v455 = vadd.f32 %v435, %v453
  %v456 = vadd.f32 %v436, %v454
  %v457 = vsub.f32 %v174, %v197
  %v458 = vsub.f32 %v175, %v198
  %v459 = vmul.f32 %v457, 1.442695
  %v460 = vpow.pop %v459
  %v461 = vmul.f32 %v458, 1.442695
  %v462 = vpow.pop %v461
  %v463 = vadd.f32 %v443, %v460
  %v464 = vadd.f32 %v444, %v462
  %v465 = vsub.f32 %v75, 13.0
  %v466 = vsub.f32 %v76, 13.0
  %v467 = vand.u32 2147483647, %v465
  %v468 = vand.u32 2147483647, %v466
  %v469 = vsub.f32 1.0, %v467
  %v470 = vsub.f32 1.0, %v468
  %v471 = vmax.f32 %v469, 0.0
  %v472 = vmax.f32 %v470, 0.0
  %v473 = vmul.f32 %v174, %v471
  %v474 = vmul.f32 %v175, %v472
  %v475 = vadd.f32 %v455, %v473
  %v476 = vadd.f32 %v456, %v474
  %v477 = vsub.f32 %v181, %v197
  %v478 = vsub.f32 %v182, %v198
  %v479 = vmul.f32 %v477, 1.442695
  %v480 = vpow.pop %v479
  %v481 = vmul.f32 %v478, 1.442695
  %v482 = vpow.pop %v481
  %v483 = vadd.f32 %v463, %v480
  %v484 = vadd.f32 %v464, %v482
  %v485 = vsub.f32 %v75, 14.0
  %v486 = vsub.f32 %v76, 14.0
  %v487 = vand.u32 2147483647, %v485
  %v488 = vand.u32 2147483647, %v486
  %v489 = vsub.f32 1.0, %v487
  %v490 = vsub.f32 1.0, %v488
  %v491 = vmax.f32 %v489, 0.0
  %v492 = vmax.f32 %v490, 0.0
  %v493 = vmul.f32 %v181, %v491
  %v494 = vmul.f32 %v182, %v492
  %v495 = vadd.f32 %v475, %v493
  %v496 = vadd.f32 %v476, %v494
  %v497 = vsub.f32 %v188, %v197
  %v498 = vsub.f32 %v189, %v198
  %v499 = vmul.f32 %v497, 1.442695
  %v500 = vpow.pop %v499
  %v501 = vmul.f32 %v498, 1.442695
  %v502 = vpow.pop %v501
  %v503 = vadd.f32 %v483, %v500
  %v504 = vadd.f32 %v484, %v502
  %v505 = vsub.f32 %v75, 15.0
  %v506 = vsub.f32 %v76, 15.0
  %v507 = vand.u32 2147483647, %v505
  %v508 = vand.u32 2147483647, %v506
  %v509 = vsub.f32 1.0, %v507
  %v510 = vsub.f32 1.0, %v508
  %v511 = vmax.f32 %v509, 0.0
  %v512 = vmax.f32 %v510, 0.0
  %v513 = vmul.f32 %v188, %v511
  %v514 = vmul.f32 %v189, %v512
  %v515 = vadd.f32 %v495, %v513
  %v516 = vadd.f32 %v496, %v514
  %v517 = vsub.f32 %v195, %v197
  %v518 = vsub.f32 %v196, %v198
  %v519 = vmul.f32 %v517, 1.442695
  %v520 = vpow.pop %v519
  %v521 = vmul.f32 %v518, 1.442695
  %v522 = vpow.pop %v521
  %v523 = vadd.f32 %v503, %v520
  %v524 = vadd.f32 %v504, %v522
  %v525 = vsub.f32 %v75, 16.0
  %v526 = vsub.f32 %v76, 16.0
  %v527 = vand.u32 2147483647, %v525
  %v528 = vand.u32 2147483647, %v526
  %v529 = vsub.f32 1.0, %v527
  %v530 = vsub.f32 1.0, %v528
  %v531 = vmax.f32 %v529, 0.0
  %v532 = vmax.f32 %v530, 0.0
  %v533 = vmul.f32 %v195, %v531
  %v534 = vmul.f32 %v196, %v532
  %v535 = vadd.f32 %v515, %v533
  %v536 = vadd.f32 %v516, %v534
  %v537 = vlog2.pop %v523
  %v538 = vmul.f32 %v537, 0.6931472
  %v539 = vlog2.pop %v524
  %v540 = vmul.f32 %v539, 0.6931472
  %v541 = vadd.f32 %v197, %v538
  %v542 = vadd.f32 %v198, %v540
  %v543 = vsub.f32 %v541, %v535
  %v544 = vsub.f32 %v542, %v536
  %s545 = scalar_lea.vmem %s1, 17
  %v546 = vld [vmem:[%s545] sm:$0x1]
  %v547 = vld [vmem:[%s545 + $0x22] sm:$0x1]
  %v548 = vunpack.c.l.bf16 %v546
  %v549 = vunpack.c.l.bf16 %v547
  %s550 = scalar_lea.vmem %s1, 18
  %v551 = vld [vmem:[%s550] sm:$0x1]
  %v552 = vld [vmem:[%s550 + $0x22] sm:$0x1]
  %v553 = vunpack.c.l.bf16 %v551
  %v554 = vunpack.c.l.bf16 %v552
  %v555 = vmax.f32 %v548, %v553
  %v556 = vmax.f32 %v549, %v554
  %s557 = scalar_lea.vmem %s1, 19
  %v558 = vld [vmem:[%s557] sm:$0x1]
  %v559 = vld [vmem:[%s557 + $0x22] sm:$0x1]
  %v560 = vunpack.c.l.bf16 %v558
  %v561 = vunpack.c.l.bf16 %v559
  %v562 = vmax.f32 %v555, %v560
  %v563 = vmax.f32 %v556, %v561
  %s564 = scalar_lea.vmem %s1, 20
  %v565 = vld [vmem:[%s564] sm:$0x1]
  %v566 = vld [vmem:[%s564 + $0x22] sm:$0x1]
  %v567 = vunpack.c.l.bf16 %v565
  %v568 = vunpack.c.l.bf16 %v566
  %v569 = vmax.f32 %v562, %v567
  %v570 = vmax.f32 %v563, %v568
  %s571 = scalar_lea.vmem %s1, 21
  %v572 = vld [vmem:[%s571] sm:$0x1]
  %v573 = vld [vmem:[%s571 + $0x22] sm:$0x1]
  %v574 = vunpack.c.l.bf16 %v572
  %v575 = vunpack.c.l.bf16 %v573
  %v576 = vmax.f32 %v569, %v574
  %v577 = vmax.f32 %v570, %v575
  %s578 = scalar_lea.vmem %s1, 22
  %v579 = vld [vmem:[%s578] sm:$0x1]
  %v580 = vld [vmem:[%s578 + $0x22] sm:$0x1]
  %v581 = vunpack.c.l.bf16 %v579
  %v582 = vunpack.c.l.bf16 %v580
  %v583 = vmax.f32 %v576, %v581
  %v584 = vmax.f32 %v577, %v582
  %s585 = scalar_lea.vmem %s1, 23
  %v586 = vld [vmem:[%s585] sm:$0x1]
  %v587 = vld [vmem:[%s585 + $0x22] sm:$0x1]
  %v588 = vunpack.c.l.bf16 %v586
  %v589 = vunpack.c.l.bf16 %v587
  %v590 = vmax.f32 %v583, %v588
  %v591 = vmax.f32 %v584, %v589
  %s592 = scalar_lea.vmem %s1, 24
  %v593 = vld [vmem:[%s592] sm:$0x1]
  %v594 = vld [vmem:[%s592 + $0x22] sm:$0x1]
  %v595 = vunpack.c.l.bf16 %v593
  %v596 = vunpack.c.l.bf16 %v594
  %v597 = vmax.f32 %v590, %v595
  %v598 = vmax.f32 %v591, %v596
  %s599 = scalar_lea.vmem %s1, 25
  %v600 = vld [vmem:[%s599] sm:$0x1]
  %v601 = vld [vmem:[%s599 + $0x22] sm:$0x1]
  %v602 = vunpack.c.l.bf16 %v600
  %v603 = vunpack.c.l.bf16 %v601
  %v604 = vmax.f32 %v597, %v602
  %v605 = vmax.f32 %v598, %v603
  %s606 = scalar_lea.vmem %s1, 26
  %v607 = vld [vmem:[%s606] sm:$0x1]
  %v608 = vld [vmem:[%s606 + $0x22] sm:$0x1]
  %v609 = vunpack.c.l.bf16 %v607
  %v610 = vunpack.c.l.bf16 %v608
  %v611 = vmax.f32 %v604, %v609
  %v612 = vmax.f32 %v605, %v610
  %s613 = scalar_lea.vmem %s1, 27
  %v614 = vld [vmem:[%s613] sm:$0x1]
  %v615 = vld [vmem:[%s613 + $0x22] sm:$0x1]
  %v616 = vunpack.c.l.bf16 %v614
  %v617 = vunpack.c.l.bf16 %v615
  %v618 = vmax.f32 %v611, %v616
  %v619 = vmax.f32 %v612, %v617
  %s620 = scalar_lea.vmem %s1, 28
  %v621 = vld [vmem:[%s620] sm:$0x1]
  %v622 = vld [vmem:[%s620 + $0x22] sm:$0x1]
  %v623 = vunpack.c.l.bf16 %v621
  %v624 = vunpack.c.l.bf16 %v622
  %v625 = vmax.f32 %v618, %v623
  %v626 = vmax.f32 %v619, %v624
  %s627 = scalar_lea.vmem %s1, 29
  %v628 = vld [vmem:[%s627] sm:$0x1]
  %v629 = vld [vmem:[%s627 + $0x22] sm:$0x1]
  %v630 = vunpack.c.l.bf16 %v628
  %v631 = vunpack.c.l.bf16 %v629
  %v632 = vmax.f32 %v625, %v630
  %v633 = vmax.f32 %v626, %v631
  %s634 = scalar_lea.vmem %s1, 30
  %v635 = vld [vmem:[%s634] sm:$0x1]
  %v636 = vld [vmem:[%s634 + $0x22] sm:$0x1]
  %v637 = vunpack.c.l.bf16 %v635
  %v638 = vunpack.c.l.bf16 %v636
  %v639 = vmax.f32 %v632, %v637
  %v640 = vmax.f32 %v633, %v638
  %s641 = scalar_lea.vmem %s1, 31
  %v642 = vld [vmem:[%s641] sm:$0x1]
  %v643 = vld [vmem:[%s641 + $0x22] sm:$0x1]
  %v644 = vunpack.c.l.bf16 %v642
  %v645 = vunpack.c.l.bf16 %v643
  %v646 = vmax.f32 %v639, %v644
  %v647 = vmax.f32 %v640, %v645
  %s648 = scalar_lea.vmem %s1, 32
  %v649 = vld [vmem:[%s648] sm:$0x1]
  %v650 = vld [vmem:[%s648 + $0x22] sm:$0x1]
  %v651 = vunpack.c.l.bf16 %v649
  %v652 = vunpack.c.l.bf16 %v650
  %v653 = vmax.f32 %v646, %v651
  %v654 = vmax.f32 %v647, %v652
  %s655 = scalar_lea.vmem %s1, 33
  %v656 = vld [vmem:[%s655] sm:$0x1]
  %v657 = vld [vmem:[%s655 + $0x22] sm:$0x1]
  %v658 = vunpack.c.l.bf16 %v656
  %v659 = vunpack.c.l.bf16 %v657
  %v660 = vmax.f32 %v653, %v658
  %v661 = vmax.f32 %v654, %v659
  %v662 = vsub.f32 %v548, %v660
  %v663 = vsub.f32 %v549, %v661
  %v664 = vmul.f32 %v662, 1.442695
  %v665 = vpow.pop %v664
  %v666 = vmul.f32 %v663, 1.442695
  %v667 = vpow.pop %v666
  %v668 = vadd.f32 %v665, 0.0
  %v669 = vadd.f32 %v667, 0.0
  %v670 = vand.u32 2147483647, %v81
  %v671 = vand.u32 2147483647, %v82
  %v672 = vsub.f32 1.0, %v670
  %v673 = vsub.f32 1.0, %v671
  %v674 = vmax.f32 %v672, 0.0
  %v675 = vmax.f32 %v673, 0.0
  %v676 = vmul.f32 %v548, %v674
  %v677 = vmul.f32 %v549, %v675
  %v678 = vadd.f32 %v676, 0.0
  %v679 = vadd.f32 %v677, 0.0
  %v680 = vsub.f32 %v553, %v660
  %v681 = vsub.f32 %v554, %v661
  %v682 = vmul.f32 %v680, 1.442695
  %v683 = vpow.pop %v682
  %v684 = vmul.f32 %v681, 1.442695
  %v685 = vpow.pop %v684
  %v686 = vadd.f32 %v668, %v683
  %v687 = vadd.f32 %v669, %v685
  %v688 = vsub.f32 %v81, 1.0
  %v689 = vsub.f32 %v82, 1.0
  %v690 = vand.u32 2147483647, %v688
  %v691 = vand.u32 2147483647, %v689
  %v692 = vsub.f32 1.0, %v690
  %v693 = vsub.f32 1.0, %v691
  %v694 = vmax.f32 %v692, 0.0
  %v695 = vmax.f32 %v693, 0.0
  %v696 = vmul.f32 %v553, %v694
  %v697 = vmul.f32 %v554, %v695
  %v698 = vadd.f32 %v678, %v696
  %v699 = vadd.f32 %v679, %v697
  %v700 = vsub.f32 %v560, %v660
  %v701 = vsub.f32 %v561, %v661
  %v702 = vmul.f32 %v700, 1.442695
  %v703 = vpow.pop %v702
  %v704 = vmul.f32 %v701, 1.442695
  %v705 = vpow.pop %v704
  %v706 = vadd.f32 %v686, %v703
  %v707 = vadd.f32 %v687, %v705
  %v708 = vsub.f32 %v81, 2.0
  %v709 = vsub.f32 %v82, 2.0
  %v710 = vand.u32 2147483647, %v708
  %v711 = vand.u32 2147483647, %v709
  %v712 = vsub.f32 1.0, %v710
  %v713 = vsub.f32 1.0, %v711
  %v714 = vmax.f32 %v712, 0.0
  %v715 = vmax.f32 %v713, 0.0
  %v716 = vmul.f32 %v560, %v714
  %v717 = vmul.f32 %v561, %v715
  %v718 = vadd.f32 %v698, %v716
  %v719 = vadd.f32 %v699, %v717
  %v720 = vsub.f32 %v567, %v660
  %v721 = vsub.f32 %v568, %v661
  %v722 = vmul.f32 %v720, 1.442695
  %v723 = vpow.pop %v722
  %v724 = vmul.f32 %v721, 1.442695
  %v725 = vpow.pop %v724
  %v726 = vadd.f32 %v706, %v723
  %v727 = vadd.f32 %v707, %v725
  %v728 = vsub.f32 %v81, 3.0
  %v729 = vsub.f32 %v82, 3.0
  %v730 = vand.u32 2147483647, %v728
  %v731 = vand.u32 2147483647, %v729
  %v732 = vsub.f32 1.0, %v730
  %v733 = vsub.f32 1.0, %v731
  %v734 = vmax.f32 %v732, 0.0
  %v735 = vmax.f32 %v733, 0.0
  %v736 = vmul.f32 %v567, %v734
  %v737 = vmul.f32 %v568, %v735
  %v738 = vadd.f32 %v718, %v736
  %v739 = vadd.f32 %v719, %v737
  %v740 = vsub.f32 %v574, %v660
  %v741 = vsub.f32 %v575, %v661
  %v742 = vmul.f32 %v740, 1.442695
  %v743 = vpow.pop %v742
  %v744 = vmul.f32 %v741, 1.442695
  %v745 = vpow.pop %v744
  %v746 = vadd.f32 %v726, %v743
  %v747 = vadd.f32 %v727, %v745
  %v748 = vsub.f32 %v81, 4.0
  %v749 = vsub.f32 %v82, 4.0
  %v750 = vand.u32 2147483647, %v748
  %v751 = vand.u32 2147483647, %v749
  %v752 = vsub.f32 1.0, %v750
  %v753 = vsub.f32 1.0, %v751
  %v754 = vmax.f32 %v752, 0.0
  %v755 = vmax.f32 %v753, 0.0
  %v756 = vmul.f32 %v574, %v754
  %v757 = vmul.f32 %v575, %v755
  %v758 = vadd.f32 %v738, %v756
  %v759 = vadd.f32 %v739, %v757
  %v760 = vsub.f32 %v581, %v660
  %v761 = vsub.f32 %v582, %v661
  %v762 = vmul.f32 %v760, 1.442695
  %v763 = vpow.pop %v762
  %v764 = vmul.f32 %v761, 1.442695
  %v765 = vpow.pop %v764
  %v766 = vadd.f32 %v746, %v763
  %v767 = vadd.f32 %v747, %v765
  %v768 = vsub.f32 %v81, 5.0
  %v769 = vsub.f32 %v82, 5.0
  %v770 = vand.u32 2147483647, %v768
  %v771 = vand.u32 2147483647, %v769
  %v772 = vsub.f32 1.0, %v770
  %v773 = vsub.f32 1.0, %v771
  %v774 = vmax.f32 %v772, 0.0
  %v775 = vmax.f32 %v773, 0.0
  %v776 = vmul.f32 %v581, %v774
  %v777 = vmul.f32 %v582, %v775
  %v778 = vadd.f32 %v758, %v776
  %v779 = vadd.f32 %v759, %v777
  %v780 = vsub.f32 %v588, %v660
  %v781 = vsub.f32 %v589, %v661
  %v782 = vmul.f32 %v780, 1.442695
  %v783 = vpow.pop %v782
  %v784 = vmul.f32 %v781, 1.442695
  %v785 = vpow.pop %v784
  %v786 = vadd.f32 %v766, %v783
  %v787 = vadd.f32 %v767, %v785
  %v788 = vsub.f32 %v81, 6.0
  %v789 = vsub.f32 %v82, 6.0
  %v790 = vand.u32 2147483647, %v788
  %v791 = vand.u32 2147483647, %v789
  %v792 = vsub.f32 1.0, %v790
  %v793 = vsub.f32 1.0, %v791
  %v794 = vmax.f32 %v792, 0.0
  %v795 = vmax.f32 %v793, 0.0
  %v796 = vmul.f32 %v588, %v794
  %v797 = vmul.f32 %v589, %v795
  %v798 = vadd.f32 %v778, %v796
  %v799 = vadd.f32 %v779, %v797
  %v800 = vsub.f32 %v595, %v660
  %v801 = vsub.f32 %v596, %v661
  %v802 = vmul.f32 %v800, 1.442695
  %v803 = vpow.pop %v802
  %v804 = vmul.f32 %v801, 1.442695
  %v805 = vpow.pop %v804
  %v806 = vadd.f32 %v786, %v803
  %v807 = vadd.f32 %v787, %v805
  %v808 = vsub.f32 %v81, 7.0
  %v809 = vsub.f32 %v82, 7.0
  %v810 = vand.u32 2147483647, %v808
  %v811 = vand.u32 2147483647, %v809
  %v812 = vsub.f32 1.0, %v810
  %v813 = vsub.f32 1.0, %v811
  %v814 = vmax.f32 %v812, 0.0
  %v815 = vmax.f32 %v813, 0.0
  %v816 = vmul.f32 %v595, %v814
  %v817 = vmul.f32 %v596, %v815
  %v818 = vadd.f32 %v798, %v816
  %v819 = vadd.f32 %v799, %v817
  %v820 = vsub.f32 %v602, %v660
  %v821 = vsub.f32 %v603, %v661
  %v822 = vmul.f32 %v820, 1.442695
  %v823 = vpow.pop %v822
  %v824 = vmul.f32 %v821, 1.442695
  %v825 = vpow.pop %v824
  %v826 = vadd.f32 %v806, %v823
  %v827 = vadd.f32 %v807, %v825
  %v828 = vsub.f32 %v81, 8.0
  %v829 = vsub.f32 %v82, 8.0
  %v830 = vand.u32 2147483647, %v828
  %v831 = vand.u32 2147483647, %v829
  %v832 = vsub.f32 1.0, %v830
  %v833 = vsub.f32 1.0, %v831
  %v834 = vmax.f32 %v832, 0.0
  %v835 = vmax.f32 %v833, 0.0
  %v836 = vmul.f32 %v602, %v834
  %v837 = vmul.f32 %v603, %v835
  %v838 = vadd.f32 %v818, %v836
  %v839 = vadd.f32 %v819, %v837
  %v840 = vsub.f32 %v609, %v660
  %v841 = vsub.f32 %v610, %v661
  %v842 = vmul.f32 %v840, 1.442695
  %v843 = vpow.pop %v842
  %v844 = vmul.f32 %v841, 1.442695
  %v845 = vpow.pop %v844
  %v846 = vadd.f32 %v826, %v843
  %v847 = vadd.f32 %v827, %v845
  %v848 = vsub.f32 %v81, 9.0
  %v849 = vsub.f32 %v82, 9.0
  %v850 = vand.u32 2147483647, %v848
  %v851 = vand.u32 2147483647, %v849
  %v852 = vsub.f32 1.0, %v850
  %v853 = vsub.f32 1.0, %v851
  %v854 = vmax.f32 %v852, 0.0
  %v855 = vmax.f32 %v853, 0.0
  %v856 = vmul.f32 %v609, %v854
  %v857 = vmul.f32 %v610, %v855
  %v858 = vadd.f32 %v838, %v856
  %v859 = vadd.f32 %v839, %v857
  %v860 = vsub.f32 %v616, %v660
  %v861 = vsub.f32 %v617, %v661
  %v862 = vmul.f32 %v860, 1.442695
  %v863 = vpow.pop %v862
  %v864 = vmul.f32 %v861, 1.442695
  %v865 = vpow.pop %v864
  %v866 = vadd.f32 %v846, %v863
  %v867 = vadd.f32 %v847, %v865
  %v868 = vsub.f32 %v81, 10.0
  %v869 = vsub.f32 %v82, 10.0
  %v870 = vand.u32 2147483647, %v868
  %v871 = vand.u32 2147483647, %v869
  %v872 = vsub.f32 1.0, %v870
  %v873 = vsub.f32 1.0, %v871
  %v874 = vmax.f32 %v872, 0.0
  %v875 = vmax.f32 %v873, 0.0
  %v876 = vmul.f32 %v616, %v874
  %v877 = vmul.f32 %v617, %v875
  %v878 = vadd.f32 %v858, %v876
  %v879 = vadd.f32 %v859, %v877
  %v880 = vsub.f32 %v623, %v660
  %v881 = vsub.f32 %v624, %v661
  %v882 = vmul.f32 %v880, 1.442695
  %v883 = vpow.pop %v882
  %v884 = vmul.f32 %v881, 1.442695
  %v885 = vpow.pop %v884
  %v886 = vadd.f32 %v866, %v883
  %v887 = vadd.f32 %v867, %v885
  %v888 = vsub.f32 %v81, 11.0
  %v889 = vsub.f32 %v82, 11.0
  %v890 = vand.u32 2147483647, %v888
  %v891 = vand.u32 2147483647, %v889
  %v892 = vsub.f32 1.0, %v890
  %v893 = vsub.f32 1.0, %v891
  %v894 = vmax.f32 %v892, 0.0
  %v895 = vmax.f32 %v893, 0.0
  %v896 = vmul.f32 %v623, %v894
  %v897 = vmul.f32 %v624, %v895
  %v898 = vadd.f32 %v878, %v896
  %v899 = vadd.f32 %v879, %v897
  %v900 = vsub.f32 %v630, %v660
  %v901 = vsub.f32 %v631, %v661
  %v902 = vmul.f32 %v900, 1.442695
  %v903 = vpow.pop %v902
  %v904 = vmul.f32 %v901, 1.442695
  %v905 = vpow.pop %v904
  %v906 = vadd.f32 %v886, %v903
  %v907 = vadd.f32 %v887, %v905
  %v908 = vsub.f32 %v81, 12.0
  %v909 = vsub.f32 %v82, 12.0
  %v910 = vand.u32 2147483647, %v908
  %v911 = vand.u32 2147483647, %v909
  %v912 = vsub.f32 1.0, %v910
  %v913 = vsub.f32 1.0, %v911
  %v914 = vmax.f32 %v912, 0.0
  %v915 = vmax.f32 %v913, 0.0
  %v916 = vmul.f32 %v630, %v914
  %v917 = vmul.f32 %v631, %v915
  %v918 = vadd.f32 %v898, %v916
  %v919 = vadd.f32 %v899, %v917
  %v920 = vsub.f32 %v637, %v660
  %v921 = vsub.f32 %v638, %v661
  %v922 = vmul.f32 %v920, 1.442695
  %v923 = vpow.pop %v922
  %v924 = vmul.f32 %v921, 1.442695
  %v925 = vpow.pop %v924
  %v926 = vadd.f32 %v906, %v923
  %v927 = vadd.f32 %v907, %v925
  %v928 = vsub.f32 %v81, 13.0
  %v929 = vsub.f32 %v82, 13.0
  %v930 = vand.u32 2147483647, %v928
  %v931 = vand.u32 2147483647, %v929
  %v932 = vsub.f32 1.0, %v930
  %v933 = vsub.f32 1.0, %v931
  %v934 = vmax.f32 %v932, 0.0
  %v935 = vmax.f32 %v933, 0.0
  %v936 = vmul.f32 %v637, %v934
  %v937 = vmul.f32 %v638, %v935
  %v938 = vadd.f32 %v918, %v936
  %v939 = vadd.f32 %v919, %v937
  %v940 = vsub.f32 %v644, %v660
  %v941 = vsub.f32 %v645, %v661
  %v942 = vmul.f32 %v940, 1.442695
  %v943 = vpow.pop %v942
  %v944 = vmul.f32 %v941, 1.442695
  %v945 = vpow.pop %v944
  %v946 = vadd.f32 %v926, %v943
  %v947 = vadd.f32 %v927, %v945
  %v948 = vsub.f32 %v81, 14.0
  %v949 = vsub.f32 %v82, 14.0
  %v950 = vand.u32 2147483647, %v948
  %v951 = vand.u32 2147483647, %v949
  %v952 = vsub.f32 1.0, %v950
  %v953 = vsub.f32 1.0, %v951
  %v954 = vmax.f32 %v952, 0.0
  %v955 = vmax.f32 %v953, 0.0
  %v956 = vmul.f32 %v644, %v954
  %v957 = vmul.f32 %v645, %v955
  %v958 = vadd.f32 %v938, %v956
  %v959 = vadd.f32 %v939, %v957
  %v960 = vsub.f32 %v651, %v660
  %v961 = vsub.f32 %v652, %v661
  %v962 = vmul.f32 %v960, 1.442695
  %v963 = vpow.pop %v962
  %v964 = vmul.f32 %v961, 1.442695
  %v965 = vpow.pop %v964
  %v966 = vadd.f32 %v946, %v963
  %v967 = vadd.f32 %v947, %v965
  %v968 = vsub.f32 %v81, 15.0
  %v969 = vsub.f32 %v82, 15.0
  %v970 = vand.u32 2147483647, %v968
  %v971 = vand.u32 2147483647, %v969
  %v972 = vsub.f32 1.0, %v970
  %v973 = vsub.f32 1.0, %v971
  %v974 = vmax.f32 %v972, 0.0
  %v975 = vmax.f32 %v973, 0.0
  %v976 = vmul.f32 %v651, %v974
  %v977 = vmul.f32 %v652, %v975
  %v978 = vadd.f32 %v958, %v976
  %v979 = vadd.f32 %v959, %v977
  %v980 = vsub.f32 %v658, %v660
  %v981 = vsub.f32 %v659, %v661
  %v982 = vmul.f32 %v980, 1.442695
  %v983 = vpow.pop %v982
  %v984 = vmul.f32 %v981, 1.442695
  %v985 = vpow.pop %v984
  %v986 = vadd.f32 %v966, %v983
  %v987 = vadd.f32 %v967, %v985
  %v988 = vsub.f32 %v81, 16.0
  %v989 = vsub.f32 %v82, 16.0
  %v990 = vand.u32 2147483647, %v988
  %v991 = vand.u32 2147483647, %v989
  %v992 = vsub.f32 1.0, %v990
  %v993 = vsub.f32 1.0, %v991
  %v994 = vmax.f32 %v992, 0.0
  %v995 = vmax.f32 %v993, 0.0
  %v996 = vmul.f32 %v658, %v994
  %v997 = vmul.f32 %v659, %v995
  %v998 = vadd.f32 %v978, %v996
  %v999 = vadd.f32 %v979, %v997
  %v1000 = vlog2.pop %v986
  %v1001 = vmul.f32 %v1000, 0.6931472
  %v1002 = vlog2.pop %v987
  %v1003 = vmul.f32 %v1002, 0.6931472
  %v1004 = vadd.f32 %v660, %v1001
  %v1005 = vadd.f32 %v661, %v1003
  %v1006 = vsub.f32 %v1004, %v998
  %v1007 = vsub.f32 %v1005, %v999
  %v1008 = vadd.f32 %v543, %v1006
  %v1009 = vadd.f32 %v544, %v1007
  %v1010 = vmul.f32 %v1008, 0.5
  %v1011 = vmul.f32 %v1009, 0.5
  %v1012 = vmul.f32 %v1010, %v11
  %v1013 = vmul.f32 %v1011, %v12
  %v1014 = vadd.f32 %v14, 0.0
  %v1015 = vadd.f32 %v15, 0.0
  %v1016 = vadd.f32 %v41, 0.0
  %v1017 = vadd.f32 %v42, 0.0
  %v1018 = vadd.f32 %v69, 0.0
  %v1019 = vadd.f32 %v70, 0.0
  %v1020 = vadd.f32 %v11, 0.0
  %v1021 = vadd.f32 %v12, 0.0
  %v1022 = vadd.f32 %v1012, 0.0
  %v1023 = vadd.f32 %v1013, 0.0
  %1024 = vst [vmem:[%s2] sm:$0x3] %v1014
  %1025 = vst [vmem:[%s2 + $0x2] sm:$0x3] %v1015
  %s1026 = scalar_lea.vmem %s2, 4
  %1027 = vst [vmem:[%s1026] sm:$0x3] %v1016
  %1028 = vst [vmem:[%s1026 + $0x2] sm:$0x3] %v1017
  %s1029 = scalar_lea.vmem %s2, 8
  %1030 = vst [vmem:[%s1029] sm:$0x3] %v1018
  %1031 = vst [vmem:[%s1029 + $0x2] sm:$0x3] %v1019
  %s1032 = scalar_lea.vmem %s2, 12
  %1033 = vst [vmem:[%s1032] sm:$0x3] %v1020
  %1034 = vst [vmem:[%s1032 + $0x2] sm:$0x3] %v1021
  %s1035 = scalar_lea.vmem %s2, 16
  %1036 = vst [vmem:[%s1035] sm:$0x3] %v1022
  %1037 = vst [vmem:[%s1035 + $0x2] sm:$0x3] %v1023
  // Predicated region
  $region10: #{bbox_loss_pallas.1} parent=0 // pred_check
    _
  $region11: #{bbox_loss_pallas.1} parent=0 // pred_check_branch
    %1039 = sbr.rel (0) target = $region13
  $region12: #{bbox_loss_pallas.1} parent=0 // pred_region
    _
  $region13: #{bbox_loss_pallas.1} parent=0 // pred_fallthru
    _
  // Predicated region
  $region14: #{bbox_loss_pallas.1} parent=0 // pred_check
    _
  $region15: #{bbox_loss_pallas.1} parent=0 // pred_check_branch
    %1041 = sbr.rel (0) target = $region17
  $region16: #{bbox_loss_pallas.1} parent=0 // pred_region
    _
  $region17: #{bbox_loss_pallas.1} parent=0 // pred_fallthru
    _

</llo_original>
